<compile_context>
chip_gen: v7x
topology: tpu7x:2x2x1
jax: 0.10.0
libtpu: 0.0.40
codegen_flags: <defaults>
</compile_context>

<pallas_src>
import functools

import jax
import jax.numpy as jnp
from jax.experimental import pallas as pl
from jax.experimental.pallas import tpu as pltpu


# ----------------------------- Pallas kernel --------------------------------

def _fused_model_kernel(tok_ref, emb_ref, wpack_ref, fcpack_ref, out_ref,
                        x_scr, seq_scr, *, H, T, B, num_layers,
                        layer_rows, fc_rows):
    """Whole model forward in one kernel invocation.

    tok_ref:    (B, T) int32 in SMEM (scalar prefetch)
    emb_ref:    (vocab, E) f32 embedding table (VMEM)
    wpack_ref:  (rows, 8H) f32 -- all LSTM weights, 8-row-aligned blocks,
                per layer: W_ih (In,8H), W_hh (H,8H), bias (1,8H),
                each [fwd | bwd] stacked on the gate axis, gates [i,f,o,g].
    fcpack_ref: (2H+1, C) f32 -- fc_w rows 0:2H, fc_b row 2H
    out_ref:    (B, C)
    x_scr:      (T*B, E) f32 scratch (gathered embeddings, time-major)
    seq_scr:    (T*B, 2H) f32 scratch (layer-0 output sequence)
    """
    H2, H3, H4, H8 = 2 * H, 3 * H, 4 * H, 8 * H
    f32, bf16 = jnp.float32, jnp.bfloat16

    # ---- 1) in-kernel embedding gather (token ids live in SMEM) ----
    for t in range(T):
        for b in range(B):
            r = t * B + b
            x_scr[r:r + 1, :] = emb_ref[pl.ds(tok_ref[b, t], 1), :]

    def stacked_cell(h, c, gate):
        # gate columns packed [i | f | o | g]: one sigmoid + two tanh per step.
        ifo = jax.nn.sigmoid(gate[:, 0:H3])
        g = jnp.tanh(gate[:, H3:H4])
        c_new = ifo[:, H:H2] * c + ifo[:, 0:H] * g
        h_new = ifo[:, H2:H3] * jnp.tanh(c_new)
        return h_new, c_new

    cur = x_scr[...]                                           # (T*B, E) f32
    last = None
    for l in range(num_layers):
        wih_off, in_rows, whh_off, b_off = layer_rows[l]
        wih = wpack_ref[wih_off:wih_off + in_rows, :].astype(bf16)   # (In, 8H)
        whh = wpack_ref[whh_off:whh_off + H, :].astype(bf16)         # (H, 8H)
        bias = wpack_ref[b_off:b_off + 1, :]                          # (1, 8H) f32

        # Whole-sequence input projection for BOTH directions: one MXU matmul.
        xp = jnp.dot(cur.astype(bf16), wih,
                     preferred_element_type=f32) + bias               # (T*B, 8H)

        if l < num_layers - 1:
            # Full stacked bidirectional recurrence (rows 0:B fwd, B:2B bwd).
            # Hoist the per-step input-gate assembly off the serial chain.
            xg = [jnp.concatenate(
                      [xp[s * B:(s + 1) * B, 0:H4],
                       xp[(T - 1 - s) * B:(T - s) * B, H4:H8]], axis=0)
                  for s in range(T)]
            row_is_fwd = jax.lax.broadcasted_iota(jnp.int32, (2 * B, 1), 0) < B
            h = jnp.zeros((2 * B, H), f32)
            c = jnp.zeros((2 * B, H), f32)
            for s in range(T):
                grec = jnp.dot(h.astype(bf16), whh,
                               preferred_element_type=f32)            # (2B, 8H)
                gsel = jnp.where(row_is_fwd, grec[:, 0:H4], grec[:, H4:H8])
                h, c = stacked_cell(h, c, xg[s] + gsel)
                # Row stores into the layer-output scratch (time-major, [fwd|bwd]).
                seq_scr[s * B:(s + 1) * B, 0:H] = h[0:B, :]
                seq_scr[(T - 1 - s) * B:(T - s) * B, H:H2] = h[B:2 * B, :]
            cur = seq_scr[...]                                         # (T*B, 2H)
        else:
            # Last layer: only out[:, -1, :] feeds the FC head.
            # Backward output at position T-1 == first bwd step from zero state
            # -> no recurrent matmul at all for the backward direction.
            zeros = jnp.zeros((B, H), f32)
            hb_last, _ = stacked_cell(zeros, zeros,
                                      xp[(T - 1) * B:T * B, H4:H8])
            # Forward-only recurrence: half-width (H,4H) recurrent dot, dead
            # backward chain dropped from the serial path.
            whh_f = whh[:, 0:H4]                                       # (H, 4H)
            hf, cf = zeros, zeros
            for s in range(T):
                grec = jnp.dot(hf.astype(bf16), whh_f,
                               preferred_element_type=f32)             # (B, 4H)
                hf, cf = stacked_cell(hf, cf,
                                      xp[s * B:(s + 1) * B, 0:H4] + grec)
            last = jnp.concatenate([hf, hb_last], axis=-1)             # (B, 2H)

    # ---- FC head ----
    fcw_off, fcb_off = fc_rows
    fc_w = fcpack_ref[fcw_off:fcw_off + H2, :].astype(bf16)            # (2H, C)
    fc_b = fcpack_ref[fcb_off:fcb_off + 1, :]                          # (1, C)
    out_ref[...] = jnp.dot(last.astype(bf16), fc_w,
                           preferred_element_type=f32) + fc_b


# ----------------------------- wrapper ---------------------------------------

def model_forward(token_ids, embedding, wpack, fcpack, *, hidden, embed,
                  num_layers, num_classes, layer_rows, fc_rows):
    """token_ids: (B, T) int32. Returns (B, num_classes) f32 logits."""
    B, T = token_ids.shape
    H = hidden

    kernel = functools.partial(
        _fused_model_kernel, H=H, T=T, B=B, num_layers=num_layers,
        layer_rows=layer_rows, fc_rows=fc_rows)

    grid_spec = pltpu.PrefetchScalarGridSpec(
        num_scalar_prefetch=1,            # token_ids -> SMEM
        grid=(1,),
        in_specs=[
            pl.BlockSpec(embedding.shape, lambda i, tok: (0, 0)),
            pl.BlockSpec(wpack.shape, lambda i, tok: (0, 0)),
            pl.BlockSpec(fcpack.shape, lambda i, tok: (0, 0)),
        ],
        out_specs=pl.BlockSpec((B, num_classes), lambda i, tok: (0, 0)),
        scratch_shapes=[
            pltpu.VMEM((T * B, embed), jnp.float32),    # gathered x (time-major)
            pltpu.VMEM((T * B, 2 * H), jnp.float32),    # layer-0 output sequence
        ],
    )

    return pl.pallas_call(
        kernel,
        out_shape=jax.ShapeDtypeStruct((B, num_classes), jnp.float32),
        grid_spec=grid_spec,
        compiler_params=pltpu.CompilerParams(
            dimension_semantics=("arbitrary",)),
    )(token_ids, embedding, wpack, fcpack)


# ----------------------------- reference (pure JAX, f32) ---------------------

def _ref_lstm_direction(x_tbi, w_ih, w_hh, b, H):
    Bsz = x_tbi.shape[1]

    def step(carry, x_t):
        h, c = carry
        gates = x_t @ w_ih + h @ w_hh + b            # gate order [i, f, o, g]
        i = jax.nn.sigmoid(gates[:, 0 * H:1 * H])
        f = jax.nn.sigmoid(gates[:, 1 * H:2 * H])
        o = jax.nn.sigmoid(gates[:, 2 * H:3 * H])
        g = jnp.tanh(gates[:, 3 * H:4 * H])
        c = f * c + i * g
        h = o * jnp.tanh(c)
        return (h, c), h

    init = (jnp.zeros((Bsz, H), jnp.float32),
            jnp.zeros((Bsz, H), jnp.float32))
    _, hs = jax.lax.scan(step, init, x_tbi)
    return hs


def _ref_forward(token_ids, params, hidden, num_layers):
    H = hidden
    emb = jnp.take(params["embedding"], token_ids, axis=0)
    out = jnp.transpose(emb, (1, 0, 2)).astype(jnp.float32)       # (T, B, E)
    for layer in range(num_layers):
        wih = params[f"l{layer}_wih"]
        whh = params[f"l{layer}_whh"]
        b = params[f"l{layer}_b"]
        of = _ref_lstm_direction(out, wih[:, :4 * H], whh[:, :4 * H],
                                 b[:, :4 * H], H)
        ob = _ref_lstm_direction(out[::-1], wih[:, 4 * H:], whh[:, 4 * H:],
                                 b[:, 4 * H:], H)[::-1]
        out = jnp.concatenate([of, ob], axis=-1)
    return out[-1] @ params["fc_w"] + params["fc_b"]


# ----------------------------- parameter init / packing ----------------------

def init_params(key, vocab, embed, hidden, num_layers, num_classes, pad_idx=0):
    params = {}
    k = key

    k, sub = jax.random.split(k)
    emb = jax.random.normal(sub, (vocab, embed), jnp.float32) * 0.1
    emb = emb.at[pad_idx].set(0.0)  # padding_idx row
    params["embedding"] = emb

    bound = 1.0 / jnp.sqrt(hidden)
    for layer in range(num_layers):
        in_size = embed if layer == 0 else 2 * hidden
        wih_parts, whh_parts, b_parts = [], [], []
        for _tag in ("fwd", "bwd"):
            k, k1, k2, k3, k4 = jax.random.split(k, 5)
            # Gate columns interpreted in packed order [i, f, o, g].
            w_ih = jax.random.uniform(k1, (in_size, 4 * hidden), jnp.float32, -bound, bound)
            w_hh = jax.random.uniform(k2, (hidden, 4 * hidden), jnp.float32, -bound, bound)
            b_ih = jax.random.uniform(k3, (4 * hidden,), jnp.float32, -bound, bound)
            b_hh = jax.random.uniform(k4, (4 * hidden,), jnp.float32, -bound, bound)
            wih_parts.append(w_ih)
            whh_parts.append(w_hh)
            b_parts.append(b_ih + b_hh)
        # Stack fwd/bwd along the gate axis -> 256 output lanes per MXU push.
        params[f"l{layer}_wih"] = jnp.concatenate(wih_parts, axis=1)   # (In, 8H)
        params[f"l{layer}_whh"] = jnp.concatenate(whh_parts, axis=1)   # (H, 8H)
        params[f"l{layer}_b"] = jnp.concatenate(b_parts)[None, :]      # (1, 8H)

    k, k1, k2 = jax.random.split(k, 3)
    fb = 1.0 / jnp.sqrt(2.0 * hidden)
    params["fc_w"] = jax.random.uniform(k1, (2 * hidden, num_classes), jnp.float32, -fb, fb)
    params["fc_b"] = jax.random.uniform(k2, (1, num_classes), jnp.float32, -fb, fb)
    return params


def pack_params(params, hidden, num_layers):
    """Pack all LSTM weights into one (rows, 8H) array (8-row aligned blocks)
    and the FC head into one (2H+1, C) array; return static row offsets."""
    blocks = []
    layer_rows = []
    off = 0

    def add(a):
        nonlocal off
        start = off
        pad = (-a.shape[0]) % 8
        if pad:
            a = jnp.concatenate([a, jnp.zeros((pad, a.shape[1]), a.dtype)], axis=0)
        blocks.append(a)
        off += a.shape[0]
        return start

    for l in range(num_layers):
        wih = params[f"l{l}_wih"]
        wih_off = add(wih)
        whh_off = add(params[f"l{l}_whh"])
        b_off = add(params[f"l{l}_b"])
        layer_rows.append((wih_off, wih.shape[0], whh_off, b_off))

    wpack = jnp.concatenate(blocks, axis=0)                      # (rows, 8H)
    fcpack = jnp.concatenate([params["fc_w"], params["fc_b"]], axis=0)  # (2H+1, C)
    fc_rows = (0, params["fc_w"].shape[0])
    return wpack, fcpack, tuple(layer_rows), fc_rows


# ----------------------------- main -------------------------------------------

if __name__ == "__main__":
    VOCAB = 50
    EMBED = 32
    HIDDEN = 32
    NUM_LAYERS = 2
    NUM_CLASSES = 2
    BATCH = 2
    SEQ = 8

    key = jax.random.PRNGKey(0)
    key, kx, kp = jax.random.split(key, 3)

    token_ids = jax.random.randint(kx, (BATCH, SEQ), 0, VOCAB, dtype=jnp.int32)
    params = init_params(kp, VOCAB, EMBED, HIDDEN, NUM_LAYERS, NUM_CLASSES)
    wpack, fcpack, layer_rows, fc_rows = pack_params(params, HIDDEN, NUM_LAYERS)

    fwd = jax.jit(functools.partial(
        model_forward, hidden=HIDDEN, embed=EMBED, num_layers=NUM_LAYERS,
        num_classes=NUM_CLASSES, layer_rows=layer_rows, fc_rows=fc_rows))

    out = jax.block_until_ready(fwd(token_ids, params["embedding"], wpack, fcpack))

    ref = jax.block_until_ready(_ref_forward(token_ids, params, HIDDEN, NUM_LAYERS))
    assert out.shape == (BATCH, NUM_CLASSES)
    # bf16 MXU operands (f32 accumulation) -> tolerance loosened per review.
    assert jnp.allclose(out, ref, atol=2e-2, rtol=2e-2), (out, ref)

    print("KERNEL_OK")
</pallas_src>

<mosaic_0001>
module attributes {stable_mosaic.version = 11 : i64} {
  func.func @_fused_model_kernel(%arg0: i32, %arg1: memref<2x8xi32, #tpu.memory_space<smem>>, %arg2: memref<50x32xf32, #tpu.memory_space<vmem>>, %arg3: memref<176x256xf32, #tpu.memory_space<vmem>>, %arg4: memref<65x2xf32, #tpu.memory_space<vmem>>, %arg5: memref<2x2xf32, #tpu.memory_space<vmem>>, %arg6: memref<16x32xf32, #tpu.memory_space<vmem>>, %arg7: memref<16x64xf32, #tpu.memory_space<vmem>>) attributes {dimension_semantics = [#tpu.dimension_semantics<arbitrary>], iteration_bounds = array<i64: 1>, scalar_prefetch = 1 : i64, scratch_operands = 2 : i64, tpu.core_type = #tpu.core_type<tc>, window_params = [{pipeline_mode = #tpu.pipeline_mode<synchronous>, transform_indices = @transform_0, window_bounds = array<i64: 50, 32>}, {pipeline_mode = #tpu.pipeline_mode<synchronous>, transform_indices = @transform_1, window_bounds = array<i64: 176, 256>}, {pipeline_mode = #tpu.pipeline_mode<synchronous>, transform_indices = @transform_2, window_bounds = array<i64: 65, 2>}, {pipeline_mode = #tpu.pipeline_mode<synchronous>, transform_indices = @transform_3, window_bounds = array<i64: 2, 2>}]} {
    %c0 = arith.constant 0 : index
    %c0_0 = arith.constant 0 : index
    %0 = memref.load %arg1[%c0, %c0_0] : memref<2x8xi32, #tpu.memory_space<smem>>
    %1 = arith.index_cast %0 : i32 to index
    %c0_1 = arith.constant 0 : index
    %2 = vector.load %arg2[%1, %c0_1] : memref<50x32xf32, #tpu.memory_space<vmem>>, vector<1x32xf32>
    %c0_2 = arith.constant 0 : index
    %c0_3 = arith.constant 0 : index
    %3 = vector.load %arg6[%c0_2, %c0_3] : memref<16x32xf32, #tpu.memory_space<vmem>>, vector<1x32xf32>
    tpu.vector_store %arg6[%c0_2, %c0_3], %2 {strides = array<i32>} : memref<16x32xf32, #tpu.memory_space<vmem>>, vector<1x32xf32>,
    %c1 = arith.constant 1 : index
    %c0_4 = arith.constant 0 : index
    %4 = memref.load %arg1[%c1, %c0_4] : memref<2x8xi32, #tpu.memory_space<smem>>
    %5 = arith.index_cast %4 : i32 to index
    %c0_5 = arith.constant 0 : index
    %6 = vector.load %arg2[%5, %c0_5] : memref<50x32xf32, #tpu.memory_space<vmem>>, vector<1x32xf32>
    %c1_6 = arith.constant 1 : index
    %c0_7 = arith.constant 0 : index
    %7 = vector.load %arg6[%c1_6, %c0_7] : memref<16x32xf32, #tpu.memory_space<vmem>>, vector<1x32xf32>
    tpu.vector_store %arg6[%c1_6, %c0_7], %6 {strides = array<i32>} : memref<16x32xf32, #tpu.memory_space<vmem>>, vector<1x32xf32>,
    %c0_8 = arith.constant 0 : index
    %c1_9 = arith.constant 1 : index
    %8 = memref.load %arg1[%c0_8, %c1_9] : memref<2x8xi32, #tpu.memory_space<smem>>
    %9 = arith.index_cast %8 : i32 to index
    %c0_10 = arith.constant 0 : index
    %10 = vector.load %arg2[%9, %c0_10] : memref<50x32xf32, #tpu.memory_space<vmem>>, vector<1x32xf32>
    %c2 = arith.constant 2 : index
    %c0_11 = arith.constant 0 : index
    %11 = vector.load %arg6[%c2, %c0_11] : memref<16x32xf32, #tpu.memory_space<vmem>>, vector<1x32xf32>
    tpu.vector_store %arg6[%c2, %c0_11], %10 {strides = array<i32>} : memref<16x32xf32, #tpu.memory_space<vmem>>, vector<1x32xf32>,
    %c1_12 = arith.constant 1 : index
    %c1_13 = arith.constant 1 : index
    %12 = memref.load %arg1[%c1_12, %c1_13] : memref<2x8xi32, #tpu.memory_space<smem>>
    %13 = arith.index_cast %12 : i32 to index
    %c0_14 = arith.constant 0 : index
    %14 = vector.load %arg2[%13, %c0_14] : memref<50x32xf32, #tpu.memory_space<vmem>>, vector<1x32xf32>
    %c3 = arith.constant 3 : index
    %c0_15 = arith.constant 0 : index
    %15 = vector.load %arg6[%c3, %c0_15] : memref<16x32xf32, #tpu.memory_space<vmem>>, vector<1x32xf32>
    tpu.vector_store %arg6[%c3, %c0_15], %14 {strides = array<i32>} : memref<16x32xf32, #tpu.memory_space<vmem>>, vector<1x32xf32>,
    %c0_16 = arith.constant 0 : index
    %c2_17 = arith.constant 2 : index
    %16 = memref.load %arg1[%c0_16, %c2_17] : memref<2x8xi32, #tpu.memory_space<smem>>
    %17 = arith.index_cast %16 : i32 to index
    %c0_18 = arith.constant 0 : index
    %18 = vector.load %arg2[%17, %c0_18] : memref<50x32xf32, #tpu.memory_space<vmem>>, vector<1x32xf32>
    %c4 = arith.constant 4 : index
    %c0_19 = arith.constant 0 : index
    %19 = vector.load %arg6[%c4, %c0_19] : memref<16x32xf32, #tpu.memory_space<vmem>>, vector<1x32xf32>
    tpu.vector_store %arg6[%c4, %c0_19], %18 {strides = array<i32>} : memref<16x32xf32, #tpu.memory_space<vmem>>, vector<1x32xf32>,
    %c1_20 = arith.constant 1 : index
    %c2_21 = arith.constant 2 : index
    %20 = memref.load %arg1[%c1_20, %c2_21] : memref<2x8xi32, #tpu.memory_space<smem>>
    %21 = arith.index_cast %20 : i32 to index
    %c0_22 = arith.constant 0 : index
    %22 = vector.load %arg2[%21, %c0_22] : memref<50x32xf32, #tpu.memory_space<vmem>>, vector<1x32xf32>
    %c5 = arith.constant 5 : index
    %c0_23 = arith.constant 0 : index
    %23 = vector.load %arg6[%c5, %c0_23] : memref<16x32xf32, #tpu.memory_space<vmem>>, vector<1x32xf32>
    tpu.vector_store %arg6[%c5, %c0_23], %22 {strides = array<i32>} : memref<16x32xf32, #tpu.memory_space<vmem>>, vector<1x32xf32>,
    %c0_24 = arith.constant 0 : index
    %c3_25 = arith.constant 3 : index
    %24 = memref.load %arg1[%c0_24, %c3_25] : memref<2x8xi32, #tpu.memory_space<smem>>
    %25 = arith.index_cast %24 : i32 to index
    %c0_26 = arith.constant 0 : index
    %26 = vector.load %arg2[%25, %c0_26] : memref<50x32xf32, #tpu.memory_space<vmem>>, vector<1x32xf32>
    %c6 = arith.constant 6 : index
    %c0_27 = arith.constant 0 : index
    %27 = vector.load %arg6[%c6, %c0_27] : memref<16x32xf32, #tpu.memory_space<vmem>>, vector<1x32xf32>
    tpu.vector_store %arg6[%c6, %c0_27], %26 {strides = array<i32>} : memref<16x32xf32, #tpu.memory_space<vmem>>, vector<1x32xf32>,
    %c1_28 = arith.constant 1 : index
    %c3_29 = arith.constant 3 : index
    %28 = memref.load %arg1[%c1_28, %c3_29] : memref<2x8xi32, #tpu.memory_space<smem>>
    %29 = arith.index_cast %28 : i32 to index
    %c0_30 = arith.constant 0 : index
    %30 = vector.load %arg2[%29, %c0_30] : memref<50x32xf32, #tpu.memory_space<vmem>>, vector<1x32xf32>
    %c7 = arith.constant 7 : index
    %c0_31 = arith.constant 0 : index
    %31 = vector.load %arg6[%c7, %c0_31] : memref<16x32xf32, #tpu.memory_space<vmem>>, vector<1x32xf32>
    tpu.vector_store %arg6[%c7, %c0_31], %30 {strides = array<i32>} : memref<16x32xf32, #tpu.memory_space<vmem>>, vector<1x32xf32>,
    %c0_32 = arith.constant 0 : index
    %c4_33 = arith.constant 4 : index
    %32 = memref.load %arg1[%c0_32, %c4_33] : memref<2x8xi32, #tpu.memory_space<smem>>
    %33 = arith.index_cast %32 : i32 to index
    %c0_34 = arith.constant 0 : index
    %34 = vector.load %arg2[%33, %c0_34] : memref<50x32xf32, #tpu.memory_space<vmem>>, vector<1x32xf32>
    %c8 = arith.constant 8 : index
    %c0_35 = arith.constant 0 : index
    %35 = vector.load %arg6[%c8, %c0_35] : memref<16x32xf32, #tpu.memory_space<vmem>>, vector<1x32xf32>
    tpu.vector_store %arg6[%c8, %c0_35], %34 {strides = array<i32>} : memref<16x32xf32, #tpu.memory_space<vmem>>, vector<1x32xf32>,
    %c1_36 = arith.constant 1 : index
    %c4_37 = arith.constant 4 : index
    %36 = memref.load %arg1[%c1_36, %c4_37] : memref<2x8xi32, #tpu.memory_space<smem>>
    %37 = arith.index_cast %36 : i32 to index
    %c0_38 = arith.constant 0 : index
    %38 = vector.load %arg2[%37, %c0_38] : memref<50x32xf32, #tpu.memory_space<vmem>>, vector<1x32xf32>
    %c9 = arith.constant 9 : index
    %c0_39 = arith.constant 0 : index
    %39 = vector.load %arg6[%c9, %c0_39] : memref<16x32xf32, #tpu.memory_space<vmem>>, vector<1x32xf32>
    tpu.vector_store %arg6[%c9, %c0_39], %38 {strides = array<i32>} : memref<16x32xf32, #tpu.memory_space<vmem>>, vector<1x32xf32>,
    %c0_40 = arith.constant 0 : index
    %c5_41 = arith.constant 5 : index
    %40 = memref.load %arg1[%c0_40, %c5_41] : memref<2x8xi32, #tpu.memory_space<smem>>
    %41 = arith.index_cast %40 : i32 to index
    %c0_42 = arith.constant 0 : index
    %42 = vector.load %arg2[%41, %c0_42] : memref<50x32xf32, #tpu.memory_space<vmem>>, vector<1x32xf32>
    %c10 = arith.constant 10 : index
    %c0_43 = arith.constant 0 : index
    %43 = vector.load %arg6[%c10, %c0_43] : memref<16x32xf32, #tpu.memory_space<vmem>>, vector<1x32xf32>
    tpu.vector_store %arg6[%c10, %c0_43], %42 {strides = array<i32>} : memref<16x32xf32, #tpu.memory_space<vmem>>, vector<1x32xf32>,
    %c1_44 = arith.constant 1 : index
    %c5_45 = arith.constant 5 : index
    %44 = memref.load %arg1[%c1_44, %c5_45] : memref<2x8xi32, #tpu.memory_space<smem>>
    %45 = arith.index_cast %44 : i32 to index
    %c0_46 = arith.constant 0 : index
    %46 = vector.load %arg2[%45, %c0_46] : memref<50x32xf32, #tpu.memory_space<vmem>>, vector<1x32xf32>
    %c11 = arith.constant 11 : index
    %c0_47 = arith.constant 0 : index
    %47 = vector.load %arg6[%c11, %c0_47] : memref<16x32xf32, #tpu.memory_space<vmem>>, vector<1x32xf32>
    tpu.vector_store %arg6[%c11, %c0_47], %46 {strides = array<i32>} : memref<16x32xf32, #tpu.memory_space<vmem>>, vector<1x32xf32>,
    %c0_48 = arith.constant 0 : index
    %c6_49 = arith.constant 6 : index
    %48 = memref.load %arg1[%c0_48, %c6_49] : memref<2x8xi32, #tpu.memory_space<smem>>
    %49 = arith.index_cast %48 : i32 to index
    %c0_50 = arith.constant 0 : index
    %50 = vector.load %arg2[%49, %c0_50] : memref<50x32xf32, #tpu.memory_space<vmem>>, vector<1x32xf32>
    %c12 = arith.constant 12 : index
    %c0_51 = arith.constant 0 : index
    %51 = vector.load %arg6[%c12, %c0_51] : memref<16x32xf32, #tpu.memory_space<vmem>>, vector<1x32xf32>
    tpu.vector_store %arg6[%c12, %c0_51], %50 {strides = array<i32>} : memref<16x32xf32, #tpu.memory_space<vmem>>, vector<1x32xf32>,
    %c1_52 = arith.constant 1 : index
    %c6_53 = arith.constant 6 : index
    %52 = memref.load %arg1[%c1_52, %c6_53] : memref<2x8xi32, #tpu.memory_space<smem>>
    %53 = arith.index_cast %52 : i32 to index
    %c0_54 = arith.constant 0 : index
    %54 = vector.load %arg2[%53, %c0_54] : memref<50x32xf32, #tpu.memory_space<vmem>>, vector<1x32xf32>
    %c13 = arith.constant 13 : index
    %c0_55 = arith.constant 0 : index
    %55 = vector.load %arg6[%c13, %c0_55] : memref<16x32xf32, #tpu.memory_space<vmem>>, vector<1x32xf32>
    tpu.vector_store %arg6[%c13, %c0_55], %54 {strides = array<i32>} : memref<16x32xf32, #tpu.memory_space<vmem>>, vector<1x32xf32>,
    %c0_56 = arith.constant 0 : index
    %c7_57 = arith.constant 7 : index
    %56 = memref.load %arg1[%c0_56, %c7_57] : memref<2x8xi32, #tpu.memory_space<smem>>
    %57 = arith.index_cast %56 : i32 to index
    %c0_58 = arith.constant 0 : index
    %58 = vector.load %arg2[%57, %c0_58] : memref<50x32xf32, #tpu.memory_space<vmem>>, vector<1x32xf32>
    %c14 = arith.constant 14 : index
    %c0_59 = arith.constant 0 : index
    %59 = vector.load %arg6[%c14, %c0_59] : memref<16x32xf32, #tpu.memory_space<vmem>>, vector<1x32xf32>
    tpu.vector_store %arg6[%c14, %c0_59], %58 {strides = array<i32>} : memref<16x32xf32, #tpu.memory_space<vmem>>, vector<1x32xf32>,
    %c1_60 = arith.constant 1 : index
    %c7_61 = arith.constant 7 : index
    %60 = memref.load %arg1[%c1_60, %c7_61] : memref<2x8xi32, #tpu.memory_space<smem>>
    %61 = arith.index_cast %60 : i32 to index
    %c0_62 = arith.constant 0 : index
    %62 = vector.load %arg2[%61, %c0_62] : memref<50x32xf32, #tpu.memory_space<vmem>>, vector<1x32xf32>
    %c15 = arith.constant 15 : index
    %c0_63 = arith.constant 0 : index
    %63 = vector.load %arg6[%c15, %c0_63] : memref<16x32xf32, #tpu.memory_space<vmem>>, vector<1x32xf32>
    tpu.vector_store %arg6[%c15, %c0_63], %62 {strides = array<i32>} : memref<16x32xf32, #tpu.memory_space<vmem>>, vector<1x32xf32>,
    %c0_64 = arith.constant 0 : index
    %c0_65 = arith.constant 0 : index
    %64 = vector.load %arg6[%c0_64, %c0_65] : memref<16x32xf32, #tpu.memory_space<vmem>>, vector<16x32xf32>
    %c0_66 = arith.constant 0 : index
    %c0_67 = arith.constant 0 : index
    %65 = vector.load %arg3[%c0_66, %c0_67] : memref<176x256xf32, #tpu.memory_space<vmem>>, vector<32x256xf32>
    %66 = arith.truncf %65 : vector<32x256xf32> to vector<32x256xbf16>
    %c32 = arith.constant 32 : index
    %c0_68 = arith.constant 0 : index
    %67 = vector.load %arg3[%c32, %c0_68] : memref<176x256xf32, #tpu.memory_space<vmem>>, vector<32x256xf32>
    %68 = arith.truncf %67 : vector<32x256xf32> to vector<32x256xbf16>
    %c64 = arith.constant 64 : index
    %c0_69 = arith.constant 0 : index
    %69 = vector.load %arg3[%c64, %c0_69] : memref<176x256xf32, #tpu.memory_space<vmem>>, vector<1x256xf32>
    %70 = arith.truncf %64 : vector<16x32xf32> to vector<16x32xbf16>
    %cst = arith.constant dense<0.000000e+00> : vector<16x256xf32>
    %71 = tpu.matmul %70, %66, %cst {dimension_numbers = #tpu.dot_dimension_numbers<[1], [0], [0], [1], [0, 0, 1, 1], [], []>} : vector<16x32xbf16>, vector<32x256xbf16>, vector<16x256xf32> -> vector<16x256xf32>
    %72 = vector.broadcast %69 : vector<1x256xf32> to vector<16x256xf32>
    %73 = arith.addf %71, %72 : vector<16x256xf32>
    %74 = vector.extract_strided_slice %73 {offsets = [0, 0], sizes = [2, 128], strides = [1, 1]} : vector<16x256xf32> to vector<2x128xf32>
    %75 = vector.extract_strided_slice %73 {offsets = [14, 128], sizes = [2, 128], strides = [1, 1]} : vector<16x256xf32> to vector<2x128xf32>
    %76 = tpu.concatenate %74, %75 in 0 : vector<2x128xf32>, vector<2x128xf32> -> vector<4x128xf32>
    %77 = vector.extract_strided_slice %73 {offsets = [2, 0], sizes = [2, 128], strides = [1, 1]} : vector<16x256xf32> to vector<2x128xf32>
    %78 = vector.extract_strided_slice %73 {offsets = [12, 128], sizes = [2, 128], strides = [1, 1]} : vector<16x256xf32> to vector<2x128xf32>
    %79 = tpu.concatenate %77, %78 in 0 : vector<2x128xf32>, vector<2x128xf32> -> vector<4x128xf32>
    %80 = vector.extract_strided_slice %73 {offsets = [4, 0], sizes = [2, 128], strides = [1, 1]} : vector<16x256xf32> to vector<2x128xf32>
    %81 = vector.extract_strided_slice %73 {offsets = [10, 128], sizes = [2, 128], strides = [1, 1]} : vector<16x256xf32> to vector<2x128xf32>
    %82 = tpu.concatenate %80, %81 in 0 : vector<2x128xf32>, vector<2x128xf32> -> vector<4x128xf32>
    %83 = vector.extract_strided_slice %73 {offsets = [6, 0], sizes = [2, 128], strides = [1, 1]} : vector<16x256xf32> to vector<2x128xf32>
    %84 = vector.extract_strided_slice %73 {offsets = [8, 128], sizes = [2, 128], strides = [1, 1]} : vector<16x256xf32> to vector<2x128xf32>
    %85 = tpu.concatenate %83, %84 in 0 : vector<2x128xf32>, vector<2x128xf32> -> vector<4x128xf32>
    %86 = vector.extract_strided_slice %73 {offsets = [8, 0], sizes = [2, 128], strides = [1, 1]} : vector<16x256xf32> to vector<2x128xf32>
    %87 = vector.extract_strided_slice %73 {offsets = [6, 128], sizes = [2, 128], strides = [1, 1]} : vector<16x256xf32> to vector<2x128xf32>
    %88 = tpu.concatenate %86, %87 in 0 : vector<2x128xf32>, vector<2x128xf32> -> vector<4x128xf32>
    %89 = vector.extract_strided_slice %73 {offsets = [10, 0], sizes = [2, 128], strides = [1, 1]} : vector<16x256xf32> to vector<2x128xf32>
    %90 = vector.extract_strided_slice %73 {offsets = [4, 128], sizes = [2, 128], strides = [1, 1]} : vector<16x256xf32> to vector<2x128xf32>
    %91 = tpu.concatenate %89, %90 in 0 : vector<2x128xf32>, vector<2x128xf32> -> vector<4x128xf32>
    %92 = vector.extract_strided_slice %73 {offsets = [12, 0], sizes = [2, 128], strides = [1, 1]} : vector<16x256xf32> to vector<2x128xf32>
    %93 = vector.extract_strided_slice %73 {offsets = [2, 128], sizes = [2, 128], strides = [1, 1]} : vector<16x256xf32> to vector<2x128xf32>
    %94 = tpu.concatenate %92, %93 in 0 : vector<2x128xf32>, vector<2x128xf32> -> vector<4x128xf32>
    %95 = vector.extract_strided_slice %73 {offsets = [14, 0], sizes = [2, 128], strides = [1, 1]} : vector<16x256xf32> to vector<2x128xf32>
    %96 = vector.extract_strided_slice %73 {offsets = [0, 128], sizes = [2, 128], strides = [1, 1]} : vector<16x256xf32> to vector<2x128xf32>
    %97 = tpu.concatenate %95, %96 in 0 : vector<2x128xf32>, vector<2x128xf32> -> vector<4x128xf32>
    %98 = tpu.iota {dimensions = array<i32: 0>} : vector<4x1xi32>
    %c2_i32 = arith.constant 2 : i32
    %99 = vector.broadcast %c2_i32 : i32 to vector<4x1xi32>
    %100 = arith.cmpi slt, %98, %99 : vector<4x1xi32>
    %cst_70 = arith.constant 0.000000e+00 : f32
    %101 = vector.broadcast %cst_70 : f32 to vector<4x32xf32>
    %cst_71 = arith.constant 0.000000e+00 : f32
    %102 = vector.broadcast %cst_71 : f32 to vector<4x32xf32>
    %103 = arith.truncf %101 : vector<4x32xf32> to vector<4x32xbf16>
    %cst_72 = arith.constant dense<0.000000e+00> : vector<4x256xf32>
    %104 = tpu.matmul %103, %68, %cst_72 {dimension_numbers = #tpu.dot_dimension_numbers<[1], [0], [0], [1], [0, 0, 1, 1], [], []>} : vector<4x32xbf16>, vector<32x256xbf16>, vector<4x256xf32> -> vector<4x256xf32>
    %105 = vector.extract_strided_slice %104 {offsets = [0, 0], sizes = [4, 128], strides = [1, 1]} : vector<4x256xf32> to vector<4x128xf32>
    %106 = vector.extract_strided_slice %104 {offsets = [0, 128], sizes = [4, 128], strides = [1, 1]} : vector<4x256xf32> to vector<4x128xf32>
    %107 = vector.shape_cast %100 : vector<4x1xi1> to vector<4x1xi1>
    %108 = vector.broadcast %107 : vector<4x1xi1> to vector<4x128xi1>
    %109 = arith.select %108, %105, %106 : vector<4x128xi1>, vector<4x128xf32>
    %110 = arith.addf %76, %109 : vector<4x128xf32>
    %111 = vector.extract_strided_slice %110 {offsets = [0, 0], sizes = [4, 96], strides = [1, 1]} : vector<4x128xf32> to vector<4x96xf32>
    %112 = arith.negf %111 : vector<4x96xf32>
    %113 = math.exp %112 : vector<4x96xf32>
    %cst_73 = arith.constant 1.000000e+00 : f32
    %114 = vector.broadcast %cst_73 : f32 to vector<4x96xf32>
    %115 = arith.addf %114, %113 : vector<4x96xf32>
    %116 = arith.divf %114, %115 : vector<4x96xf32>
    %117 = vector.extract_strided_slice %110 {offsets = [0, 96], sizes = [4, 32], strides = [1, 1]} : vector<4x128xf32> to vector<4x32xf32>
    %118 = math.tanh %117 : vector<4x32xf32>
    %119 = vector.extract_strided_slice %116 {offsets = [0, 32], sizes = [4, 32], strides = [1, 1]} : vector<4x96xf32> to vector<4x32xf32>
    %120 = arith.mulf %119, %102 : vector<4x32xf32>
    %121 = vector.extract_strided_slice %116 {offsets = [0, 0], sizes = [4, 32], strides = [1, 1]} : vector<4x96xf32> to vector<4x32xf32>
    %122 = arith.mulf %121, %118 : vector<4x32xf32>
    %123 = arith.addf %120, %122 : vector<4x32xf32>
    %124 = vector.extract_strided_slice %116 {offsets = [0, 64], sizes = [4, 32], strides = [1, 1]} : vector<4x96xf32> to vector<4x32xf32>
    %125 = math.tanh %123 : vector<4x32xf32>
    %126 = arith.mulf %124, %125 : vector<4x32xf32>
    %127 = vector.extract_strided_slice %126 {offsets = [0, 0], sizes = [2, 32], strides = [1, 1]} : vector<4x32xf32> to vector<2x32xf32>
    %c0_74 = arith.constant 0 : index
    %c0_75 = arith.constant 0 : index
    %128 = vector.load %arg7[%c0_74, %c0_75] : memref<16x64xf32, #tpu.memory_space<vmem>>, vector<2x32xf32>
    tpu.vector_store %arg7[%c0_74, %c0_75], %127 {strides = array<i32>} : memref<16x64xf32, #tpu.memory_space<vmem>>, vector<2x32xf32>,
    %129 = vector.extract_strided_slice %126 {offsets = [2, 0], sizes = [2, 32], strides = [1, 1]} : vector<4x32xf32> to vector<2x32xf32>
    %c14_76 = arith.constant 14 : index
    %c32_77 = arith.constant 32 : index
    %130 = vector.load %arg7[%c14_76, %c32_77] : memref<16x64xf32, #tpu.memory_space<vmem>>, vector<2x32xf32>
    tpu.vector_store %arg7[%c14_76, %c32_77], %129 {strides = array<i32>} : memref<16x64xf32, #tpu.memory_space<vmem>>, vector<2x32xf32>,
    %131 = arith.truncf %126 : vector<4x32xf32> to vector<4x32xbf16>
    %cst_78 = arith.constant dense<0.000000e+00> : vector<4x256xf32>
    %132 = tpu.matmul %131, %68, %cst_78 {dimension_numbers = #tpu.dot_dimension_numbers<[1], [0], [0], [1], [0, 0, 1, 1], [], []>} : vector<4x32xbf16>, vector<32x256xbf16>, vector<4x256xf32> -> vector<4x256xf32>
    %133 = vector.extract_strided_slice %132 {offsets = [0, 0], sizes = [4, 128], strides = [1, 1]} : vector<4x256xf32> to vector<4x128xf32>
    %134 = vector.extract_strided_slice %132 {offsets = [0, 128], sizes = [4, 128], strides = [1, 1]} : vector<4x256xf32> to vector<4x128xf32>
    %135 = vector.shape_cast %100 : vector<4x1xi1> to vector<4x1xi1>
    %136 = vector.broadcast %135 : vector<4x1xi1> to vector<4x128xi1>
    %137 = arith.select %136, %133, %134 : vector<4x128xi1>, vector<4x128xf32>
    %138 = arith.addf %79, %137 : vector<4x128xf32>
    %139 = vector.extract_strided_slice %138 {offsets = [0, 0], sizes = [4, 96], strides = [1, 1]} : vector<4x128xf32> to vector<4x96xf32>
    %140 = arith.negf %139 : vector<4x96xf32>
    %141 = math.exp %140 : vector<4x96xf32>
    %cst_79 = arith.constant 1.000000e+00 : f32
    %142 = vector.broadcast %cst_79 : f32 to vector<4x96xf32>
    %143 = arith.addf %142, %141 : vector<4x96xf32>
    %144 = arith.divf %142, %143 : vector<4x96xf32>
    %145 = vector.extract_strided_slice %138 {offsets = [0, 96], sizes = [4, 32], strides = [1, 1]} : vector<4x128xf32> to vector<4x32xf32>
    %146 = math.tanh %145 : vector<4x32xf32>
    %147 = vector.extract_strided_slice %144 {offsets = [0, 32], sizes = [4, 32], strides = [1, 1]} : vector<4x96xf32> to vector<4x32xf32>
    %148 = arith.mulf %147, %123 : vector<4x32xf32>
    %149 = vector.extract_strided_slice %144 {offsets = [0, 0], sizes = [4, 32], strides = [1, 1]} : vector<4x96xf32> to vector<4x32xf32>
    %150 = arith.mulf %149, %146 : vector<4x32xf32>
    %151 = arith.addf %148, %150 : vector<4x32xf32>
    %152 = vector.extract_strided_slice %144 {offsets = [0, 64], sizes = [4, 32], strides = [1, 1]} : vector<4x96xf32> to vector<4x32xf32>
    %153 = math.tanh %151 : vector<4x32xf32>
    %154 = arith.mulf %152, %153 : vector<4x32xf32>
    %155 = vector.extract_strided_slice %154 {offsets = [0, 0], sizes = [2, 32], strides = [1, 1]} : vector<4x32xf32> to vector<2x32xf32>
    %c2_80 = arith.constant 2 : index
    %c0_81 = arith.constant 0 : index
    %156 = vector.load %arg7[%c2_80, %c0_81] : memref<16x64xf32, #tpu.memory_space<vmem>>, vector<2x32xf32>
    tpu.vector_store %arg7[%c2_80, %c0_81], %155 {strides = array<i32>} : memref<16x64xf32, #tpu.memory_space<vmem>>, vector<2x32xf32>,
    %157 = vector.extract_strided_slice %154 {offsets = [2, 0], sizes = [2, 32], strides = [1, 1]} : vector<4x32xf32> to vector<2x32xf32>
    %c12_82 = arith.constant 12 : index
    %c32_83 = arith.constant 32 : index
    %158 = vector.load %arg7[%c12_82, %c32_83] : memref<16x64xf32, #tpu.memory_space<vmem>>, vector<2x32xf32>
    tpu.vector_store %arg7[%c12_82, %c32_83], %157 {strides = array<i32>} : memref<16x64xf32, #tpu.memory_space<vmem>>, vector<2x32xf32>,
    %159 = arith.truncf %154 : vector<4x32xf32> to vector<4x32xbf16>
    %cst_84 = arith.constant dense<0.000000e+00> : vector<4x256xf32>
    %160 = tpu.matmul %159, %68, %cst_84 {dimension_numbers = #tpu.dot_dimension_numbers<[1], [0], [0], [1], [0, 0, 1, 1], [], []>} : vector<4x32xbf16>, vector<32x256xbf16>, vector<4x256xf32> -> vector<4x256xf32>
    %161 = vector.extract_strided_slice %160 {offsets = [0, 0], sizes = [4, 128], strides = [1, 1]} : vector<4x256xf32> to vector<4x128xf32>
    %162 = vector.extract_strided_slice %160 {offsets = [0, 128], sizes = [4, 128], strides = [1, 1]} : vector<4x256xf32> to vector<4x128xf32>
    %163 = vector.shape_cast %100 : vector<4x1xi1> to vector<4x1xi1>
    %164 = vector.broadcast %163 : vector<4x1xi1> to vector<4x128xi1>
    %165 = arith.select %164, %161, %162 : vector<4x128xi1>, vector<4x128xf32>
    %166 = arith.addf %82, %165 : vector<4x128xf32>
    %167 = vector.extract_strided_slice %166 {offsets = [0, 0], sizes = [4, 96], strides = [1, 1]} : vector<4x128xf32> to vector<4x96xf32>
    %168 = arith.negf %167 : vector<4x96xf32>
    %169 = math.exp %168 : vector<4x96xf32>
    %cst_85 = arith.constant 1.000000e+00 : f32
    %170 = vector.broadcast %cst_85 : f32 to vector<4x96xf32>
    %171 = arith.addf %170, %169 : vector<4x96xf32>
    %172 = arith.divf %170, %171 : vector<4x96xf32>
    %173 = vector.extract_strided_slice %166 {offsets = [0, 96], sizes = [4, 32], strides = [1, 1]} : vector<4x128xf32> to vector<4x32xf32>
    %174 = math.tanh %173 : vector<4x32xf32>
    %175 = vector.extract_strided_slice %172 {offsets = [0, 32], sizes = [4, 32], strides = [1, 1]} : vector<4x96xf32> to vector<4x32xf32>
    %176 = arith.mulf %175, %151 : vector<4x32xf32>
    %177 = vector.extract_strided_slice %172 {offsets = [0, 0], sizes = [4, 32], strides = [1, 1]} : vector<4x96xf32> to vector<4x32xf32>
    %178 = arith.mulf %177, %174 : vector<4x32xf32>
    %179 = arith.addf %176, %178 : vector<4x32xf32>
    %180 = vector.extract_strided_slice %172 {offsets = [0, 64], sizes = [4, 32], strides = [1, 1]} : vector<4x96xf32> to vector<4x32xf32>
    %181 = math.tanh %179 : vector<4x32xf32>
    %182 = arith.mulf %180, %181 : vector<4x32xf32>
    %183 = vector.extract_strided_slice %182 {offsets = [0, 0], sizes = [2, 32], strides = [1, 1]} : vector<4x32xf32> to vector<2x32xf32>
    %c4_86 = arith.constant 4 : index
    %c0_87 = arith.constant 0 : index
    %184 = vector.load %arg7[%c4_86, %c0_87] : memref<16x64xf32, #tpu.memory_space<vmem>>, vector<2x32xf32>
    tpu.vector_store %arg7[%c4_86, %c0_87], %183 {strides = array<i32>} : memref<16x64xf32, #tpu.memory_space<vmem>>, vector<2x32xf32>,
    %185 = vector.extract_strided_slice %182 {offsets = [2, 0], sizes = [2, 32], strides = [1, 1]} : vector<4x32xf32> to vector<2x32xf32>
    %c10_88 = arith.constant 10 : index
    %c32_89 = arith.constant 32 : index
    %186 = vector.load %arg7[%c10_88, %c32_89] : memref<16x64xf32, #tpu.memory_space<vmem>>, vector<2x32xf32>
    tpu.vector_store %arg7[%c10_88, %c32_89], %185 {strides = array<i32>} : memref<16x64xf32, #tpu.memory_space<vmem>>, vector<2x32xf32>,
    %187 = arith.truncf %182 : vector<4x32xf32> to vector<4x32xbf16>
    %cst_90 = arith.constant dense<0.000000e+00> : vector<4x256xf32>
    %188 = tpu.matmul %187, %68, %cst_90 {dimension_numbers = #tpu.dot_dimension_numbers<[1], [0], [0], [1], [0, 0, 1, 1], [], []>} : vector<4x32xbf16>, vector<32x256xbf16>, vector<4x256xf32> -> vector<4x256xf32>
    %189 = vector.extract_strided_slice %188 {offsets = [0, 0], sizes = [4, 128], strides = [1, 1]} : vector<4x256xf32> to vector<4x128xf32>
    %190 = vector.extract_strided_slice %188 {offsets = [0, 128], sizes = [4, 128], strides = [1, 1]} : vector<4x256xf32> to vector<4x128xf32>
    %191 = vector.shape_cast %100 : vector<4x1xi1> to vector<4x1xi1>
    %192 = vector.broadcast %191 : vector<4x1xi1> to vector<4x128xi1>
    %193 = arith.select %192, %189, %190 : vector<4x128xi1>, vector<4x128xf32>
    %194 = arith.addf %85, %193 : vector<4x128xf32>
    %195 = vector.extract_strided_slice %194 {offsets = [0, 0], sizes = [4, 96], strides = [1, 1]} : vector<4x128xf32> to vector<4x96xf32>
    %196 = arith.negf %195 : vector<4x96xf32>
    %197 = math.exp %196 : vector<4x96xf32>
    %cst_91 = arith.constant 1.000000e+00 : f32
    %198 = vector.broadcast %cst_91 : f32 to vector<4x96xf32>
    %199 = arith.addf %198, %197 : vector<4x96xf32>
    %200 = arith.divf %198, %199 : vector<4x96xf32>
    %201 = vector.extract_strided_slice %194 {offsets = [0, 96], sizes = [4, 32], strides = [1, 1]} : vector<4x128xf32> to vector<4x32xf32>
    %202 = math.tanh %201 : vector<4x32xf32>
    %203 = vector.extract_strided_slice %200 {offsets = [0, 32], sizes = [4, 32], strides = [1, 1]} : vector<4x96xf32> to vector<4x32xf32>
    %204 = arith.mulf %203, %179 : vector<4x32xf32>
    %205 = vector.extract_strided_slice %200 {offsets = [0, 0], sizes = [4, 32], strides = [1, 1]} : vector<4x96xf32> to vector<4x32xf32>
    %206 = arith.mulf %205, %202 : vector<4x32xf32>
    %207 = arith.addf %204, %206 : vector<4x32xf32>
    %208 = vector.extract_strided_slice %200 {offsets = [0, 64], sizes = [4, 32], strides = [1, 1]} : vector<4x96xf32> to vector<4x32xf32>
    %209 = math.tanh %207 : vector<4x32xf32>
    %210 = arith.mulf %208, %209 : vector<4x32xf32>
    %211 = vector.extract_strided_slice %210 {offsets = [0, 0], sizes = [2, 32], strides = [1, 1]} : vector<4x32xf32> to vector<2x32xf32>
    %c6_92 = arith.constant 6 : index
    %c0_93 = arith.constant 0 : index
    %212 = vector.load %arg7[%c6_92, %c0_93] : memref<16x64xf32, #tpu.memory_space<vmem>>, vector<2x32xf32>
    tpu.vector_store %arg7[%c6_92, %c0_93], %211 {strides = array<i32>} : memref<16x64xf32, #tpu.memory_space<vmem>>, vector<2x32xf32>,
    %213 = vector.extract_strided_slice %210 {offsets = [2, 0], sizes = [2, 32], strides = [1, 1]} : vector<4x32xf32> to vector<2x32xf32>
    %c8_94 = arith.constant 8 : index
    %c32_95 = arith.constant 32 : index
    %214 = vector.load %arg7[%c8_94, %c32_95] : memref<16x64xf32, #tpu.memory_space<vmem>>, vector<2x32xf32>
    tpu.vector_store %arg7[%c8_94, %c32_95], %213 {strides = array<i32>} : memref<16x64xf32, #tpu.memory_space<vmem>>, vector<2x32xf32>,
    %215 = arith.truncf %210 : vector<4x32xf32> to vector<4x32xbf16>
    %cst_96 = arith.constant dense<0.000000e+00> : vector<4x256xf32>
    %216 = tpu.matmul %215, %68, %cst_96 {dimension_numbers = #tpu.dot_dimension_numbers<[1], [0], [0], [1], [0, 0, 1, 1], [], []>} : vector<4x32xbf16>, vector<32x256xbf16>, vector<4x256xf32> -> vector<4x256xf32>
    %217 = vector.extract_strided_slice %216 {offsets = [0, 0], sizes = [4, 128], strides = [1, 1]} : vector<4x256xf32> to vector<4x128xf32>
    %218 = vector.extract_strided_slice %216 {offsets = [0, 128], sizes = [4, 128], strides = [1, 1]} : vector<4x256xf32> to vector<4x128xf32>
    %219 = vector.shape_cast %100 : vector<4x1xi1> to vector<4x1xi1>
    %220 = vector.broadcast %219 : vector<4x1xi1> to vector<4x128xi1>
    %221 = arith.select %220, %217, %218 : vector<4x128xi1>, vector<4x128xf32>
    %222 = arith.addf %88, %221 : vector<4x128xf32>
    %223 = vector.extract_strided_slice %222 {offsets = [0, 0], sizes = [4, 96], strides = [1, 1]} : vector<4x128xf32> to vector<4x96xf32>
    %224 = arith.negf %223 : vector<4x96xf32>
    %225 = math.exp %224 : vector<4x96xf32>
    %cst_97 = arith.constant 1.000000e+00 : f32
    %226 = vector.broadcast %cst_97 : f32 to vector<4x96xf32>
    %227 = arith.addf %226, %225 : vector<4x96xf32>
    %228 = arith.divf %226, %227 : vector<4x96xf32>
    %229 = vector.extract_strided_slice %222 {offsets = [0, 96], sizes = [4, 32], strides = [1, 1]} : vector<4x128xf32> to vector<4x32xf32>
    %230 = math.tanh %229 : vector<4x32xf32>
    %231 = vector.extract_strided_slice %228 {offsets = [0, 32], sizes = [4, 32], strides = [1, 1]} : vector<4x96xf32> to vector<4x32xf32>
    %232 = arith.mulf %231, %207 : vector<4x32xf32>
    %233 = vector.extract_strided_slice %228 {offsets = [0, 0], sizes = [4, 32], strides = [1, 1]} : vector<4x96xf32> to vector<4x32xf32>
    %234 = arith.mulf %233, %230 : vector<4x32xf32>
    %235 = arith.addf %232, %234 : vector<4x32xf32>
    %236 = vector.extract_strided_slice %228 {offsets = [0, 64], sizes = [4, 32], strides = [1, 1]} : vector<4x96xf32> to vector<4x32xf32>
    %237 = math.tanh %235 : vector<4x32xf32>
    %238 = arith.mulf %236, %237 : vector<4x32xf32>
    %239 = vector.extract_strided_slice %238 {offsets = [0, 0], sizes = [2, 32], strides = [1, 1]} : vector<4x32xf32> to vector<2x32xf32>
    %c8_98 = arith.constant 8 : index
    %c0_99 = arith.constant 0 : index
    %240 = vector.load %arg7[%c8_98, %c0_99] : memref<16x64xf32, #tpu.memory_space<vmem>>, vector<2x32xf32>
    tpu.vector_store %arg7[%c8_98, %c0_99], %239 {strides = array<i32>} : memref<16x64xf32, #tpu.memory_space<vmem>>, vector<2x32xf32>,
    %241 = vector.extract_strided_slice %238 {offsets = [2, 0], sizes = [2, 32], strides = [1, 1]} : vector<4x32xf32> to vector<2x32xf32>
    %c6_100 = arith.constant 6 : index
    %c32_101 = arith.constant 32 : index
    %242 = vector.load %arg7[%c6_100, %c32_101] : memref<16x64xf32, #tpu.memory_space<vmem>>, vector<2x32xf32>
    tpu.vector_store %arg7[%c6_100, %c32_101], %241 {strides = array<i32>} : memref<16x64xf32, #tpu.memory_space<vmem>>, vector<2x32xf32>,
    %243 = arith.truncf %238 : vector<4x32xf32> to vector<4x32xbf16>
    %cst_102 = arith.constant dense<0.000000e+00> : vector<4x256xf32>
    %244 = tpu.matmul %243, %68, %cst_102 {dimension_numbers = #tpu.dot_dimension_numbers<[1], [0], [0], [1], [0, 0, 1, 1], [], []>} : vector<4x32xbf16>, vector<32x256xbf16>, vector<4x256xf32> -> vector<4x256xf32>
    %245 = vector.extract_strided_slice %244 {offsets = [0, 0], sizes = [4, 128], strides = [1, 1]} : vector<4x256xf32> to vector<4x128xf32>
    %246 = vector.extract_strided_slice %244 {offsets = [0, 128], sizes = [4, 128], strides = [1, 1]} : vector<4x256xf32> to vector<4x128xf32>
    %247 = vector.shape_cast %100 : vector<4x1xi1> to vector<4x1xi1>
    %248 = vector.broadcast %247 : vector<4x1xi1> to vector<4x128xi1>
    %249 = arith.select %248, %245, %246 : vector<4x128xi1>, vector<4x128xf32>
    %250 = arith.addf %91, %249 : vector<4x128xf32>
    %251 = vector.extract_strided_slice %250 {offsets = [0, 0], sizes = [4, 96], strides = [1, 1]} : vector<4x128xf32> to vector<4x96xf32>
    %252 = arith.negf %251 : vector<4x96xf32>
    %253 = math.exp %252 : vector<4x96xf32>
    %cst_103 = arith.constant 1.000000e+00 : f32
    %254 = vector.broadcast %cst_103 : f32 to vector<4x96xf32>
    %255 = arith.addf %254, %253 : vector<4x96xf32>
    %256 = arith.divf %254, %255 : vector<4x96xf32>
    %257 = vector.extract_strided_slice %250 {offsets = [0, 96], sizes = [4, 32], strides = [1, 1]} : vector<4x128xf32> to vector<4x32xf32>
    %258 = math.tanh %257 : vector<4x32xf32>
    %259 = vector.extract_strided_slice %256 {offsets = [0, 32], sizes = [4, 32], strides = [1, 1]} : vector<4x96xf32> to vector<4x32xf32>
    %260 = arith.mulf %259, %235 : vector<4x32xf32>
    %261 = vector.extract_strided_slice %256 {offsets = [0, 0], sizes = [4, 32], strides = [1, 1]} : vector<4x96xf32> to vector<4x32xf32>
    %262 = arith.mulf %261, %258 : vector<4x32xf32>
    %263 = arith.addf %260, %262 : vector<4x32xf32>
    %264 = vector.extract_strided_slice %256 {offsets = [0, 64], sizes = [4, 32], strides = [1, 1]} : vector<4x96xf32> to vector<4x32xf32>
    %265 = math.tanh %263 : vector<4x32xf32>
    %266 = arith.mulf %264, %265 : vector<4x32xf32>
    %267 = vector.extract_strided_slice %266 {offsets = [0, 0], sizes = [2, 32], strides = [1, 1]} : vector<4x32xf32> to vector<2x32xf32>
    %c10_104 = arith.constant 10 : index
    %c0_105 = arith.constant 0 : index
    %268 = vector.load %arg7[%c10_104, %c0_105] : memref<16x64xf32, #tpu.memory_space<vmem>>, vector<2x32xf32>
    tpu.vector_store %arg7[%c10_104, %c0_105], %267 {strides = array<i32>} : memref<16x64xf32, #tpu.memory_space<vmem>>, vector<2x32xf32>,
    %269 = vector.extract_strided_slice %266 {offsets = [2, 0], sizes = [2, 32], strides = [1, 1]} : vector<4x32xf32> to vector<2x32xf32>
    %c4_106 = arith.constant 4 : index
    %c32_107 = arith.constant 32 : index
    %270 = vector.load %arg7[%c4_106, %c32_107] : memref<16x64xf32, #tpu.memory_space<vmem>>, vector<2x32xf32>
    tpu.vector_store %arg7[%c4_106, %c32_107], %269 {strides = array<i32>} : memref<16x64xf32, #tpu.memory_space<vmem>>, vector<2x32xf32>,
    %271 = arith.truncf %266 : vector<4x32xf32> to vector<4x32xbf16>
    %cst_108 = arith.constant dense<0.000000e+00> : vector<4x256xf32>
    %272 = tpu.matmul %271, %68, %cst_108 {dimension_numbers = #tpu.dot_dimension_numbers<[1], [0], [0], [1], [0, 0, 1, 1], [], []>} : vector<4x32xbf16>, vector<32x256xbf16>, vector<4x256xf32> -> vector<4x256xf32>
    %273 = vector.extract_strided_slice %272 {offsets = [0, 0], sizes = [4, 128], strides = [1, 1]} : vector<4x256xf32> to vector<4x128xf32>
    %274 = vector.extract_strided_slice %272 {offsets = [0, 128], sizes = [4, 128], strides = [1, 1]} : vector<4x256xf32> to vector<4x128xf32>
    %275 = vector.shape_cast %100 : vector<4x1xi1> to vector<4x1xi1>
    %276 = vector.broadcast %275 : vector<4x1xi1> to vector<4x128xi1>
    %277 = arith.select %276, %273, %274 : vector<4x128xi1>, vector<4x128xf32>
    %278 = arith.addf %94, %277 : vector<4x128xf32>
    %279 = vector.extract_strided_slice %278 {offsets = [0, 0], sizes = [4, 96], strides = [1, 1]} : vector<4x128xf32> to vector<4x96xf32>
    %280 = arith.negf %279 : vector<4x96xf32>
    %281 = math.exp %280 : vector<4x96xf32>
    %cst_109 = arith.constant 1.000000e+00 : f32
    %282 = vector.broadcast %cst_109 : f32 to vector<4x96xf32>
    %283 = arith.addf %282, %281 : vector<4x96xf32>
    %284 = arith.divf %282, %283 : vector<4x96xf32>
    %285 = vector.extract_strided_slice %278 {offsets = [0, 96], sizes = [4, 32], strides = [1, 1]} : vector<4x128xf32> to vector<4x32xf32>
    %286 = math.tanh %285 : vector<4x32xf32>
    %287 = vector.extract_strided_slice %284 {offsets = [0, 32], sizes = [4, 32], strides = [1, 1]} : vector<4x96xf32> to vector<4x32xf32>
    %288 = arith.mulf %287, %263 : vector<4x32xf32>
    %289 = vector.extract_strided_slice %284 {offsets = [0, 0], sizes = [4, 32], strides = [1, 1]} : vector<4x96xf32> to vector<4x32xf32>
    %290 = arith.mulf %289, %286 : vector<4x32xf32>
    %291 = arith.addf %288, %290 : vector<4x32xf32>
    %292 = vector.extract_strided_slice %284 {offsets = [0, 64], sizes = [4, 32], strides = [1, 1]} : vector<4x96xf32> to vector<4x32xf32>
    %293 = math.tanh %291 : vector<4x32xf32>
    %294 = arith.mulf %292, %293 : vector<4x32xf32>
    %295 = vector.extract_strided_slice %294 {offsets = [0, 0], sizes = [2, 32], strides = [1, 1]} : vector<4x32xf32> to vector<2x32xf32>
    %c12_110 = arith.constant 12 : index
    %c0_111 = arith.constant 0 : index
    %296 = vector.load %arg7[%c12_110, %c0_111] : memref<16x64xf32, #tpu.memory_space<vmem>>, vector<2x32xf32>
    tpu.vector_store %arg7[%c12_110, %c0_111], %295 {strides = array<i32>} : memref<16x64xf32, #tpu.memory_space<vmem>>, vector<2x32xf32>,
    %297 = vector.extract_strided_slice %294 {offsets = [2, 0], sizes = [2, 32], strides = [1, 1]} : vector<4x32xf32> to vector<2x32xf32>
    %c2_112 = arith.constant 2 : index
    %c32_113 = arith.constant 32 : index
    %298 = vector.load %arg7[%c2_112, %c32_113] : memref<16x64xf32, #tpu.memory_space<vmem>>, vector<2x32xf32>
    tpu.vector_store %arg7[%c2_112, %c32_113], %297 {strides = array<i32>} : memref<16x64xf32, #tpu.memory_space<vmem>>, vector<2x32xf32>,
    %299 = arith.truncf %294 : vector<4x32xf32> to vector<4x32xbf16>
    %cst_114 = arith.constant dense<0.000000e+00> : vector<4x256xf32>
    %300 = tpu.matmul %299, %68, %cst_114 {dimension_numbers = #tpu.dot_dimension_numbers<[1], [0], [0], [1], [0, 0, 1, 1], [], []>} : vector<4x32xbf16>, vector<32x256xbf16>, vector<4x256xf32> -> vector<4x256xf32>
    %301 = vector.extract_strided_slice %300 {offsets = [0, 0], sizes = [4, 128], strides = [1, 1]} : vector<4x256xf32> to vector<4x128xf32>
    %302 = vector.extract_strided_slice %300 {offsets = [0, 128], sizes = [4, 128], strides = [1, 1]} : vector<4x256xf32> to vector<4x128xf32>
    %303 = vector.shape_cast %100 : vector<4x1xi1> to vector<4x1xi1>
    %304 = vector.broadcast %303 : vector<4x1xi1> to vector<4x128xi1>
    %305 = arith.select %304, %301, %302 : vector<4x128xi1>, vector<4x128xf32>
    %306 = arith.addf %97, %305 : vector<4x128xf32>
    %307 = vector.extract_strided_slice %306 {offsets = [0, 0], sizes = [4, 96], strides = [1, 1]} : vector<4x128xf32> to vector<4x96xf32>
    %308 = arith.negf %307 : vector<4x96xf32>
    %309 = math.exp %308 : vector<4x96xf32>
    %cst_115 = arith.constant 1.000000e+00 : f32
    %310 = vector.broadcast %cst_115 : f32 to vector<4x96xf32>
    %311 = arith.addf %310, %309 : vector<4x96xf32>
    %312 = arith.divf %310, %311 : vector<4x96xf32>
    %313 = vector.extract_strided_slice %306 {offsets = [0, 96], sizes = [4, 32], strides = [1, 1]} : vector<4x128xf32> to vector<4x32xf32>
    %314 = math.tanh %313 : vector<4x32xf32>
    %315 = vector.extract_strided_slice %312 {offsets = [0, 32], sizes = [4, 32], strides = [1, 1]} : vector<4x96xf32> to vector<4x32xf32>
    %316 = arith.mulf %315, %291 : vector<4x32xf32>
    %317 = vector.extract_strided_slice %312 {offsets = [0, 0], sizes = [4, 32], strides = [1, 1]} : vector<4x96xf32> to vector<4x32xf32>
    %318 = arith.mulf %317, %314 : vector<4x32xf32>
    %319 = arith.addf %316, %318 : vector<4x32xf32>
    %320 = vector.extract_strided_slice %312 {offsets = [0, 64], sizes = [4, 32], strides = [1, 1]} : vector<4x96xf32> to vector<4x32xf32>
    %321 = math.tanh %319 : vector<4x32xf32>
    %322 = arith.mulf %320, %321 : vector<4x32xf32>
    %323 = vector.extract_strided_slice %322 {offsets = [0, 0], sizes = [2, 32], strides = [1, 1]} : vector<4x32xf32> to vector<2x32xf32>
    %c14_116 = arith.constant 14 : index
    %c0_117 = arith.constant 0 : index
    %324 = vector.load %arg7[%c14_116, %c0_117] : memref<16x64xf32, #tpu.memory_space<vmem>>, vector<2x32xf32>
    tpu.vector_store %arg7[%c14_116, %c0_117], %323 {strides = array<i32>} : memref<16x64xf32, #tpu.memory_space<vmem>>, vector<2x32xf32>,
    %325 = vector.extract_strided_slice %322 {offsets = [2, 0], sizes = [2, 32], strides = [1, 1]} : vector<4x32xf32> to vector<2x32xf32>
    %c0_118 = arith.constant 0 : index
    %c32_119 = arith.constant 32 : index
    %326 = vector.load %arg7[%c0_118, %c32_119] : memref<16x64xf32, #tpu.memory_space<vmem>>, vector<2x32xf32>
    tpu.vector_store %arg7[%c0_118, %c32_119], %325 {strides = array<i32>} : memref<16x64xf32, #tpu.memory_space<vmem>>, vector<2x32xf32>,
    %c0_120 = arith.constant 0 : index
    %c0_121 = arith.constant 0 : index
    %327 = vector.load %arg7[%c0_120, %c0_121] : memref<16x64xf32, #tpu.memory_space<vmem>>, vector<16x64xf32>
    %c72 = arith.constant 72 : index
    %c0_122 = arith.constant 0 : index
    %328 = vector.load %arg3[%c72, %c0_122] : memref<176x256xf32, #tpu.memory_space<vmem>>, vector<64x256xf32>
    %329 = arith.truncf %328 : vector<64x256xf32> to vector<64x256xbf16>
    %c136 = arith.constant 136 : index
    %c0_123 = arith.constant 0 : index
    %330 = vector.load %arg3[%c136, %c0_123] : memref<176x256xf32, #tpu.memory_space<vmem>>, vector<32x256xf32>
    %331 = arith.truncf %330 : vector<32x256xf32> to vector<32x256xbf16>
    %c168 = arith.constant 168 : index
    %c0_124 = arith.constant 0 : index
    %332 = vector.load %arg3[%c168, %c0_124] : memref<176x256xf32, #tpu.memory_space<vmem>>, vector<1x256xf32>
    %333 = arith.truncf %327 : vector<16x64xf32> to vector<16x64xbf16>
    %cst_125 = arith.constant dense<0.000000e+00> : vector<16x256xf32>
    %334 = tpu.matmul %333, %329, %cst_125 {dimension_numbers = #tpu.dot_dimension_numbers<[1], [0], [0], [1], [0, 0, 1, 1], [], []>} : vector<16x64xbf16>, vector<64x256xbf16>, vector<16x256xf32> -> vector<16x256xf32>
    %335 = vector.broadcast %332 : vector<1x256xf32> to vector<16x256xf32>
    %336 = arith.addf %334, %335 : vector<16x256xf32>
    %cst_126 = arith.constant 0.000000e+00 : f32
    %337 = vector.broadcast %cst_126 : f32 to vector<2x32xf32>
    %338 = vector.extract_strided_slice %336 {offsets = [14, 128], sizes = [2, 128], strides = [1, 1]} : vector<16x256xf32> to vector<2x128xf32>
    %339 = vector.extract_strided_slice %338 {offsets = [0, 0], sizes = [2, 96], strides = [1, 1]} : vector<2x128xf32> to vector<2x96xf32>
    %340 = arith.negf %339 : vector<2x96xf32>
    %341 = math.exp %340 : vector<2x96xf32>
    %cst_127 = arith.constant 1.000000e+00 : f32
    %342 = vector.broadcast %cst_127 : f32 to vector<2x96xf32>
    %343 = arith.addf %342, %341 : vector<2x96xf32>
    %344 = arith.divf %342, %343 : vector<2x96xf32>
    %345 = vector.extract_strided_slice %338 {offsets = [0, 96], sizes = [2, 32], strides = [1, 1]} : vector<2x128xf32> to vector<2x32xf32>
    %346 = math.tanh %345 : vector<2x32xf32>
    %347 = vector.extract_strided_slice %344 {offsets = [0, 32], sizes = [2, 32], strides = [1, 1]} : vector<2x96xf32> to vector<2x32xf32>
    %348 = arith.mulf %347, %337 : vector<2x32xf32>
    %349 = vector.extract_strided_slice %344 {offsets = [0, 0], sizes = [2, 32], strides = [1, 1]} : vector<2x96xf32> to vector<2x32xf32>
    %350 = arith.mulf %349, %346 : vector<2x32xf32>
    %351 = arith.addf %348, %350 : vector<2x32xf32>
    %352 = vector.extract_strided_slice %344 {offsets = [0, 64], sizes = [2, 32], strides = [1, 1]} : vector<2x96xf32> to vector<2x32xf32>
    %353 = math.tanh %351 : vector<2x32xf32>
    %354 = arith.mulf %352, %353 : vector<2x32xf32>
    %355 = vector.extract_strided_slice %331 {offsets = [0, 0], sizes = [32, 128], strides = [1, 1]} : vector<32x256xbf16> to vector<32x128xbf16>
    %356 = arith.truncf %337 : vector<2x32xf32> to vector<2x32xbf16>
    %cst_128 = arith.constant dense<0.000000e+00> : vector<2x128xf32>
    %357 = tpu.matmul %356, %355, %cst_128 {dimension_numbers = #tpu.dot_dimension_numbers<[1], [0], [0], [1], [0, 0, 1, 1], [], []>} : vector<2x32xbf16>, vector<32x128xbf16>, vector<2x128xf32> -> vector<2x128xf32>
    %358 = vector.extract_strided_slice %336 {offsets = [0, 0], sizes = [2, 128], strides = [1, 1]} : vector<16x256xf32> to vector<2x128xf32>
    %359 = arith.addf %358, %357 : vector<2x128xf32>
    %360 = vector.extract_strided_slice %359 {offsets = [0, 0], sizes = [2, 96], strides = [1, 1]} : vector<2x128xf32> to vector<2x96xf32>
    %361 = arith.negf %360 : vector<2x96xf32>
    %362 = math.exp %361 : vector<2x96xf32>
    %cst_129 = arith.constant 1.000000e+00 : f32
    %363 = vector.broadcast %cst_129 : f32 to vector<2x96xf32>
    %364 = arith.addf %363, %362 : vector<2x96xf32>
    %365 = arith.divf %363, %364 : vector<2x96xf32>
    %366 = vector.extract_strided_slice %359 {offsets = [0, 96], sizes = [2, 32], strides = [1, 1]} : vector<2x128xf32> to vector<2x32xf32>
    %367 = math.tanh %366 : vector<2x32xf32>
    %368 = vector.extract_strided_slice %365 {offsets = [0, 32], sizes = [2, 32], strides = [1, 1]} : vector<2x96xf32> to vector<2x32xf32>
    %369 = arith.mulf %368, %337 : vector<2x32xf32>
    %370 = vector.extract_strided_slice %365 {offsets = [0, 0], sizes = [2, 32], strides = [1, 1]} : vector<2x96xf32> to vector<2x32xf32>
    %371 = arith.mulf %370, %367 : vector<2x32xf32>
    %372 = arith.addf %369, %371 : vector<2x32xf32>
    %373 = vector.extract_strided_slice %365 {offsets = [0, 64], sizes = [2, 32], strides = [1, 1]} : vector<2x96xf32> to vector<2x32xf32>
    %374 = math.tanh %372 : vector<2x32xf32>
    %375 = arith.mulf %373, %374 : vector<2x32xf32>
    %376 = arith.truncf %375 : vector<2x32xf32> to vector<2x32xbf16>
    %cst_130 = arith.constant dense<0.000000e+00> : vector<2x128xf32>
    %377 = tpu.matmul %376, %355, %cst_130 {dimension_numbers = #tpu.dot_dimension_numbers<[1], [0], [0], [1], [0, 0, 1, 1], [], []>} : vector<2x32xbf16>, vector<32x128xbf16>, vector<2x128xf32> -> vector<2x128xf32>
    %378 = vector.extract_strided_slice %336 {offsets = [2, 0], sizes = [2, 128], strides = [1, 1]} : vector<16x256xf32> to vector<2x128xf32>
    %379 = arith.addf %378, %377 : vector<2x128xf32>
    %380 = vector.extract_strided_slice %379 {offsets = [0, 0], sizes = [2, 96], strides = [1, 1]} : vector<2x128xf32> to vector<2x96xf32>
    %381 = arith.negf %380 : vector<2x96xf32>
    %382 = math.exp %381 : vector<2x96xf32>
    %cst_131 = arith.constant 1.000000e+00 : f32
    %383 = vector.broadcast %cst_131 : f32 to vector<2x96xf32>
    %384 = arith.addf %383, %382 : vector<2x96xf32>
    %385 = arith.divf %383, %384 : vector<2x96xf32>
    %386 = vector.extract_strided_slice %379 {offsets = [0, 96], sizes = [2, 32], strides = [1, 1]} : vector<2x128xf32> to vector<2x32xf32>
    %387 = math.tanh %386 : vector<2x32xf32>
    %388 = vector.extract_strided_slice %385 {offsets = [0, 32], sizes = [2, 32], strides = [1, 1]} : vector<2x96xf32> to vector<2x32xf32>
    %389 = arith.mulf %388, %372 : vector<2x32xf32>
    %390 = vector.extract_strided_slice %385 {offsets = [0, 0], sizes = [2, 32], strides = [1, 1]} : vector<2x96xf32> to vector<2x32xf32>
    %391 = arith.mulf %390, %387 : vector<2x32xf32>
    %392 = arith.addf %389, %391 : vector<2x32xf32>
    %393 = vector.extract_strided_slice %385 {offsets = [0, 64], sizes = [2, 32], strides = [1, 1]} : vector<2x96xf32> to vector<2x32xf32>
    %394 = math.tanh %392 : vector<2x32xf32>
    %395 = arith.mulf %393, %394 : vector<2x32xf32>
    %396 = arith.truncf %395 : vector<2x32xf32> to vector<2x32xbf16>
    %cst_132 = arith.constant dense<0.000000e+00> : vector<2x128xf32>
    %397 = tpu.matmul %396, %355, %cst_132 {dimension_numbers = #tpu.dot_dimension_numbers<[1], [0], [0], [1], [0, 0, 1, 1], [], []>} : vector<2x32xbf16>, vector<32x128xbf16>, vector<2x128xf32> -> vector<2x128xf32>
    %398 = vector.extract_strided_slice %336 {offsets = [4, 0], sizes = [2, 128], strides = [1, 1]} : vector<16x256xf32> to vector<2x128xf32>
    %399 = arith.addf %398, %397 : vector<2x128xf32>
    %400 = vector.extract_strided_slice %399 {offsets = [0, 0], sizes = [2, 96], strides = [1, 1]} : vector<2x128xf32> to vector<2x96xf32>
    %401 = arith.negf %400 : vector<2x96xf32>
    %402 = math.exp %401 : vector<2x96xf32>
    %cst_133 = arith.constant 1.000000e+00 : f32
    %403 = vector.broadcast %cst_133 : f32 to vector<2x96xf32>
    %404 = arith.addf %403, %402 : vector<2x96xf32>
    %405 = arith.divf %403, %404 : vector<2x96xf32>
    %406 = vector.extract_strided_slice %399 {offsets = [0, 96], sizes = [2, 32], strides = [1, 1]} : vector<2x128xf32> to vector<2x32xf32>
    %407 = math.tanh %406 : vector<2x32xf32>
    %408 = vector.extract_strided_slice %405 {offsets = [0, 32], sizes = [2, 32], strides = [1, 1]} : vector<2x96xf32> to vector<2x32xf32>
    %409 = arith.mulf %408, %392 : vector<2x32xf32>
    %410 = vector.extract_strided_slice %405 {offsets = [0, 0], sizes = [2, 32], strides = [1, 1]} : vector<2x96xf32> to vector<2x32xf32>
    %411 = arith.mulf %410, %407 : vector<2x32xf32>
    %412 = arith.addf %409, %411 : vector<2x32xf32>
    %413 = vector.extract_strided_slice %405 {offsets = [0, 64], sizes = [2, 32], strides = [1, 1]} : vector<2x96xf32> to vector<2x32xf32>
    %414 = math.tanh %412 : vector<2x32xf32>
    %415 = arith.mulf %413, %414 : vector<2x32xf32>
    %416 = arith.truncf %415 : vector<2x32xf32> to vector<2x32xbf16>
    %cst_134 = arith.constant dense<0.000000e+00> : vector<2x128xf32>
    %417 = tpu.matmul %416, %355, %cst_134 {dimension_numbers = #tpu.dot_dimension_numbers<[1], [0], [0], [1], [0, 0, 1, 1], [], []>} : vector<2x32xbf16>, vector<32x128xbf16>, vector<2x128xf32> -> vector<2x128xf32>
    %418 = vector.extract_strided_slice %336 {offsets = [6, 0], sizes = [2, 128], strides = [1, 1]} : vector<16x256xf32> to vector<2x128xf32>
    %419 = arith.addf %418, %417 : vector<2x128xf32>
    %420 = vector.extract_strided_slice %419 {offsets = [0, 0], sizes = [2, 96], strides = [1, 1]} : vector<2x128xf32> to vector<2x96xf32>
    %421 = arith.negf %420 : vector<2x96xf32>
    %422 = math.exp %421 : vector<2x96xf32>
    %cst_135 = arith.constant 1.000000e+00 : f32
    %423 = vector.broadcast %cst_135 : f32 to vector<2x96xf32>
    %424 = arith.addf %423, %422 : vector<2x96xf32>
    %425 = arith.divf %423, %424 : vector<2x96xf32>
    %426 = vector.extract_strided_slice %419 {offsets = [0, 96], sizes = [2, 32], strides = [1, 1]} : vector<2x128xf32> to vector<2x32xf32>
    %427 = math.tanh %426 : vector<2x32xf32>
    %428 = vector.extract_strided_slice %425 {offsets = [0, 32], sizes = [2, 32], strides = [1, 1]} : vector<2x96xf32> to vector<2x32xf32>
    %429 = arith.mulf %428, %412 : vector<2x32xf32>
    %430 = vector.extract_strided_slice %425 {offsets = [0, 0], sizes = [2, 32], strides = [1, 1]} : vector<2x96xf32> to vector<2x32xf32>
    %431 = arith.mulf %430, %427 : vector<2x32xf32>
    %432 = arith.addf %429, %431 : vector<2x32xf32>
    %433 = vector.extract_strided_slice %425 {offsets = [0, 64], sizes = [2, 32], strides = [1, 1]} : vector<2x96xf32> to vector<2x32xf32>
    %434 = math.tanh %432 : vector<2x32xf32>
    %435 = arith.mulf %433, %434 : vector<2x32xf32>
    %436 = arith.truncf %435 : vector<2x32xf32> to vector<2x32xbf16>
    %cst_136 = arith.constant dense<0.000000e+00> : vector<2x128xf32>
    %437 = tpu.matmul %436, %355, %cst_136 {dimension_numbers = #tpu.dot_dimension_numbers<[1], [0], [0], [1], [0, 0, 1, 1], [], []>} : vector<2x32xbf16>, vector<32x128xbf16>, vector<2x128xf32> -> vector<2x128xf32>
    %438 = vector.extract_strided_slice %336 {offsets = [8, 0], sizes = [2, 128], strides = [1, 1]} : vector<16x256xf32> to vector<2x128xf32>
    %439 = arith.addf %438, %437 : vector<2x128xf32>
    %440 = vector.extract_strided_slice %439 {offsets = [0, 0], sizes = [2, 96], strides = [1, 1]} : vector<2x128xf32> to vector<2x96xf32>
    %441 = arith.negf %440 : vector<2x96xf32>
    %442 = math.exp %441 : vector<2x96xf32>
    %cst_137 = arith.constant 1.000000e+00 : f32
    %443 = vector.broadcast %cst_137 : f32 to vector<2x96xf32>
    %444 = arith.addf %443, %442 : vector<2x96xf32>
    %445 = arith.divf %443, %444 : vector<2x96xf32>
    %446 = vector.extract_strided_slice %439 {offsets = [0, 96], sizes = [2, 32], strides = [1, 1]} : vector<2x128xf32> to vector<2x32xf32>
    %447 = math.tanh %446 : vector<2x32xf32>
    %448 = vector.extract_strided_slice %445 {offsets = [0, 32], sizes = [2, 32], strides = [1, 1]} : vector<2x96xf32> to vector<2x32xf32>
    %449 = arith.mulf %448, %432 : vector<2x32xf32>
    %450 = vector.extract_strided_slice %445 {offsets = [0, 0], sizes = [2, 32], strides = [1, 1]} : vector<2x96xf32> to vector<2x32xf32>
    %451 = arith.mulf %450, %447 : vector<2x32xf32>
    %452 = arith.addf %449, %451 : vector<2x32xf32>
    %453 = vector.extract_strided_slice %445 {offsets = [0, 64], sizes = [2, 32], strides = [1, 1]} : vector<2x96xf32> to vector<2x32xf32>
    %454 = math.tanh %452 : vector<2x32xf32>
    %455 = arith.mulf %453, %454 : vector<2x32xf32>
    %456 = arith.truncf %455 : vector<2x32xf32> to vector<2x32xbf16>
    %cst_138 = arith.constant dense<0.000000e+00> : vector<2x128xf32>
    %457 = tpu.matmul %456, %355, %cst_138 {dimension_numbers = #tpu.dot_dimension_numbers<[1], [0], [0], [1], [0, 0, 1, 1], [], []>} : vector<2x32xbf16>, vector<32x128xbf16>, vector<2x128xf32> -> vector<2x128xf32>
    %458 = vector.extract_strided_slice %336 {offsets = [10, 0], sizes = [2, 128], strides = [1, 1]} : vector<16x256xf32> to vector<2x128xf32>
    %459 = arith.addf %458, %457 : vector<2x128xf32>
    %460 = vector.extract_strided_slice %459 {offsets = [0, 0], sizes = [2, 96], strides = [1, 1]} : vector<2x128xf32> to vector<2x96xf32>
    %461 = arith.negf %460 : vector<2x96xf32>
    %462 = math.exp %461 : vector<2x96xf32>
    %cst_139 = arith.constant 1.000000e+00 : f32
    %463 = vector.broadcast %cst_139 : f32 to vector<2x96xf32>
    %464 = arith.addf %463, %462 : vector<2x96xf32>
    %465 = arith.divf %463, %464 : vector<2x96xf32>
    %466 = vector.extract_strided_slice %459 {offsets = [0, 96], sizes = [2, 32], strides = [1, 1]} : vector<2x128xf32> to vector<2x32xf32>
    %467 = math.tanh %466 : vector<2x32xf32>
    %468 = vector.extract_strided_slice %465 {offsets = [0, 32], sizes = [2, 32], strides = [1, 1]} : vector<2x96xf32> to vector<2x32xf32>
    %469 = arith.mulf %468, %452 : vector<2x32xf32>
    %470 = vector.extract_strided_slice %465 {offsets = [0, 0], sizes = [2, 32], strides = [1, 1]} : vector<2x96xf32> to vector<2x32xf32>
    %471 = arith.mulf %470, %467 : vector<2x32xf32>
    %472 = arith.addf %469, %471 : vector<2x32xf32>
    %473 = vector.extract_strided_slice %465 {offsets = [0, 64], sizes = [2, 32], strides = [1, 1]} : vector<2x96xf32> to vector<2x32xf32>
    %474 = math.tanh %472 : vector<2x32xf32>
    %475 = arith.mulf %473, %474 : vector<2x32xf32>
    %476 = arith.truncf %475 : vector<2x32xf32> to vector<2x32xbf16>
    %cst_140 = arith.constant dense<0.000000e+00> : vector<2x128xf32>
    %477 = tpu.matmul %476, %355, %cst_140 {dimension_numbers = #tpu.dot_dimension_numbers<[1], [0], [0], [1], [0, 0, 1, 1], [], []>} : vector<2x32xbf16>, vector<32x128xbf16>, vector<2x128xf32> -> vector<2x128xf32>
    %478 = vector.extract_strided_slice %336 {offsets = [12, 0], sizes = [2, 128], strides = [1, 1]} : vector<16x256xf32> to vector<2x128xf32>
    %479 = arith.addf %478, %477 : vector<2x128xf32>
    %480 = vector.extract_strided_slice %479 {offsets = [0, 0], sizes = [2, 96], strides = [1, 1]} : vector<2x128xf32> to vector<2x96xf32>
    %481 = arith.negf %480 : vector<2x96xf32>
    %482 = math.exp %481 : vector<2x96xf32>
    %cst_141 = arith.constant 1.000000e+00 : f32
    %483 = vector.broadcast %cst_141 : f32 to vector<2x96xf32>
    %484 = arith.addf %483, %482 : vector<2x96xf32>
    %485 = arith.divf %483, %484 : vector<2x96xf32>
    %486 = vector.extract_strided_slice %479 {offsets = [0, 96], sizes = [2, 32], strides = [1, 1]} : vector<2x128xf32> to vector<2x32xf32>
    %487 = math.tanh %486 : vector<2x32xf32>
    %488 = vector.extract_strided_slice %485 {offsets = [0, 32], sizes = [2, 32], strides = [1, 1]} : vector<2x96xf32> to vector<2x32xf32>
    %489 = arith.mulf %488, %472 : vector<2x32xf32>
    %490 = vector.extract_strided_slice %485 {offsets = [0, 0], sizes = [2, 32], strides = [1, 1]} : vector<2x96xf32> to vector<2x32xf32>
    %491 = arith.mulf %490, %487 : vector<2x32xf32>
    %492 = arith.addf %489, %491 : vector<2x32xf32>
    %493 = vector.extract_strided_slice %485 {offsets = [0, 64], sizes = [2, 32], strides = [1, 1]} : vector<2x96xf32> to vector<2x32xf32>
    %494 = math.tanh %492 : vector<2x32xf32>
    %495 = arith.mulf %493, %494 : vector<2x32xf32>
    %496 = arith.truncf %495 : vector<2x32xf32> to vector<2x32xbf16>
    %cst_142 = arith.constant dense<0.000000e+00> : vector<2x128xf32>
    %497 = tpu.matmul %496, %355, %cst_142 {dimension_numbers = #tpu.dot_dimension_numbers<[1], [0], [0], [1], [0, 0, 1, 1], [], []>} : vector<2x32xbf16>, vector<32x128xbf16>, vector<2x128xf32> -> vector<2x128xf32>
    %498 = vector.extract_strided_slice %336 {offsets = [14, 0], sizes = [2, 128], strides = [1, 1]} : vector<16x256xf32> to vector<2x128xf32>
    %499 = arith.addf %498, %497 : vector<2x128xf32>
    %500 = vector.extract_strided_slice %499 {offsets = [0, 0], sizes = [2, 96], strides = [1, 1]} : vector<2x128xf32> to vector<2x96xf32>
    %501 = arith.negf %500 : vector<2x96xf32>
    %502 = math.exp %501 : vector<2x96xf32>
    %cst_143 = arith.constant 1.000000e+00 : f32
    %503 = vector.broadcast %cst_143 : f32 to vector<2x96xf32>
    %504 = arith.addf %503, %502 : vector<2x96xf32>
    %505 = arith.divf %503, %504 : vector<2x96xf32>
    %506 = vector.extract_strided_slice %499 {offsets = [0, 96], sizes = [2, 32], strides = [1, 1]} : vector<2x128xf32> to vector<2x32xf32>
    %507 = math.tanh %506 : vector<2x32xf32>
    %508 = vector.extract_strided_slice %505 {offsets = [0, 32], sizes = [2, 32], strides = [1, 1]} : vector<2x96xf32> to vector<2x32xf32>
    %509 = arith.mulf %508, %492 : vector<2x32xf32>
    %510 = vector.extract_strided_slice %505 {offsets = [0, 0], sizes = [2, 32], strides = [1, 1]} : vector<2x96xf32> to vector<2x32xf32>
    %511 = arith.mulf %510, %507 : vector<2x32xf32>
    %512 = arith.addf %509, %511 : vector<2x32xf32>
    %513 = vector.extract_strided_slice %505 {offsets = [0, 64], sizes = [2, 32], strides = [1, 1]} : vector<2x96xf32> to vector<2x32xf32>
    %514 = math.tanh %512 : vector<2x32xf32>
    %515 = arith.mulf %513, %514 : vector<2x32xf32>
    %516 = tpu.concatenate %515, %354 in 1 : vector<2x32xf32>, vector<2x32xf32> -> vector<2x64xf32>
    %c0_144 = arith.constant 0 : index
    %c0_145 = arith.constant 0 : index
    %517 = vector.load %arg4[%c0_144, %c0_145] : memref<65x2xf32, #tpu.memory_space<vmem>>, vector<64x2xf32>
    %518 = arith.truncf %517 : vector<64x2xf32> to vector<64x2xbf16>
    %c64_146 = arith.constant 64 : index
    %c0_147 = arith.constant 0 : index
    %519 = vector.load %arg4[%c64_146, %c0_147] : memref<65x2xf32, #tpu.memory_space<vmem>>, vector<1x2xf32>
    %520 = arith.truncf %516 : vector<2x64xf32> to vector<2x64xbf16>
    %cst_148 = arith.constant dense<0.000000e+00> : vector<2x2xf32>
    %521 = tpu.matmul %520, %518, %cst_148 {dimension_numbers = #tpu.dot_dimension_numbers<[1], [0], [0], [1], [0, 0, 1, 1], [], []>} : vector<2x64xbf16>, vector<64x2xbf16>, vector<2x2xf32> -> vector<2x2xf32>
    %522 = vector.broadcast %519 : vector<1x2xf32> to vector<2x2xf32>
    %523 = arith.addf %521, %522 : vector<2x2xf32>
    %c0_149 = arith.constant 0 : index
    %c0_150 = arith.constant 0 : index
    %524 = vector.load %arg5[%c0_149, %c0_150] : memref<2x2xf32, #tpu.memory_space<vmem>>, vector<2x2xf32>
    tpu.vector_store %arg5[%c0_149, %c0_150], %523 {strides = array<i32>} : memref<2x2xf32, #tpu.memory_space<vmem>>, vector<2x2xf32>,
    return
  }
  func.func @transform_0(%arg0: i32, %arg1: memref<2x8xi32, #tpu.memory_space<smem>>) -> (i32, i32) {
    %c0_i32 = arith.constant 0 : i32
    %c0_i32_0 = arith.constant 0 : i32
    %c0_i32_1 = arith.constant 0 : i32
    return %c0_i32, %c0_i32_0 : i32, i32
  }
  func.func @transform_1(%arg0: i32, %arg1: memref<2x8xi32, #tpu.memory_space<smem>>) -> (i32, i32) {
    %c0_i32 = arith.constant 0 : i32
    %c0_i32_0 = arith.constant 0 : i32
    %c0_i32_1 = arith.constant 0 : i32
    return %c0_i32, %c0_i32_0 : i32, i32
  }
  func.func @transform_2(%arg0: i32, %arg1: memref<2x8xi32, #tpu.memory_space<smem>>) -> (i32, i32) {
    %c0_i32 = arith.constant 0 : i32
    %c0_i32_0 = arith.constant 0 : i32
    %c0_i32_1 = arith.constant 0 : i32
    return %c0_i32, %c0_i32_0 : i32, i32
  }
  func.func @transform_3(%arg0: i32, %arg1: memref<2x8xi32, #tpu.memory_space<smem>>) -> (i32, i32) {
    %c0_i32 = arith.constant 0 : i32
    %c0_i32_0 = arith.constant 0 : i32
    %c0_i32_1 = arith.constant 0 : i32
    return %c0_i32, %c0_i32_0 : i32, i32
  }
}

</mosaic_0001>

<llo_original>
// kernel: model_forward.1
$region0: #{model_forward.1}
  #allocation0 [shape = 'u32[]', space=smem, size = 0x4, offset = 0x4, fixed_abs, tag = 'smem constant byte address 0x4 - core index']
  #allocation1 [shape = 'u32[144,128]{1,0:T(1,128)}', space=vmem, size = 0x12000, scoped, tag = 'internal scratch']
  #allocation2 [shape = 'f32[16,32]{1,0:T(8,128)}', space=vmem, size = 0x2000, scoped, tag = 'scratch operand']
  #allocation3 [shape = 'f32[16,64]{1,0:T(8,128)}', space=vmem, size = 0x2000, scoped, tag = 'scratch operand']
  #allocation4 [shape = 's32[1]{0}', space=sflag, size = 0x4, scoped, tag = 'scoped memory for model_forward.1']
  #allocation5 [shape = 'u8[1024]{0}', space=smem, size = 0x400, scoped, tag = 'prefetched SMEM operand 0']
  %s0 = inlined_call_operand.vmem [shape: s32[2,8], index: 0, kind: input, shape index: {}]
  %s1 = inlined_call_operand.vmem [shape: f32[50,32], index: 1, kind: input, shape index: {}]
  %s2 = inlined_call_operand.hbm [shape: f32[176,256], index: 2, kind: input, shape index: {}]
  %s3 = inlined_call_operand.vmem [shape: f32[65,2], index: 3, kind: input, shape index: {}]
  %s4 = inlined_call_operand.hbm [shape: f32[2,2], index: 4, kind: output, shape index: {}]
  %s5 = sld [smem:[#allocation0]]
  $region26: #{model_forward.1} parent=0
    _
  %s7 = ssub.s32 1, %s5
  %s8 = scalar_select 0, %s7, %s5
  %s9 = sshll.u32 %s0, 4
  %s10 = int_to_ptr.vmem [resolvable:$true] %s9
  %12 = dma.vmem_to_smem %s10, 32, [#allocation5], [#allocation4]
  %13 = dma.done [#allocation4], 32
  %14 = sfence
  $region1: #{model_forward.1} parent=0
    #allocation6 [shape = 'u8[180224]{0}', space=vmem, size = 0x2c000, scoped, tag = 'input window, operand 2, single buffered']
    #allocation7 [shape = 's32[1]{0}', space=sflag, size = 0x4, scoped, tag = 'scoped memory for model_forward.1']
    #allocation8 [shape = 's32[1]{0}', space=sflag, size = 0x4, scoped, tag = 'scoped memory for model_forward.1']
    #allocation9 [shape = 'u8[1024]{0}', space=vmem, size = 0x400, scoped, tag = 'output window, operand 0, single buffered']
    %15 = vsyncpa [#allocation7], 0
    %16 = vsyncpa [#allocation8], 0
    // Predicated region
    $region2: #{model_forward.1} parent=1 // pred_check
      _
    $region3: #{model_forward.1} parent=1 // pred_check_branch
      %18 = sbr.rel (0) target = $region5
    $region4: #{model_forward.1} parent=1 // pred_region
      _
    $region5: #{model_forward.1} parent=1 // pred_fallthru
      _
    // Predicated region
    $region6: #{model_forward.1} parent=1 // pred_check
      _
    $region7: #{model_forward.1} parent=1 // pred_check_branch
      %20 = sbr.rel (0) target = $region9
    $region8: #{model_forward.1} parent=1 // pred_region
      %s22 = ssub.s32 5632, 5632
      %23 = vsyncadd [#allocation7], %s22
      %s24 = sshll.u32 [#allocation6], 4
      %s25 = int_to_ptr.vmem [resolvable:$true] %s24
      %30 = dma.hbm_to_vmem [thread:$0]  %s2, 5632, %s25, [#allocation7], 256, 256, 16
    $region9: #{model_forward.1} parent=1 // pred_fallthru
      _
    // Predicated region
    $region10: #{model_forward.1} parent=1 // pred_check
      _
    $region11: #{model_forward.1} parent=1 // pred_check_branch
      %32 = sbr.rel (0) target = $region13
    $region12: #{model_forward.1} parent=1 // pred_region
      _
    $region13: #{model_forward.1} parent=1 // pred_fallthru
      _
    // Predicated region
    $region14: #{model_forward.1} parent=1 // pred_check
      _
    $region15: #{model_forward.1} parent=1 // pred_check_branch
      %34 = sbr.rel (0) target = $region17
    $region16: #{model_forward.1} parent=1 // pred_region
      %35 = dma.done [#allocation7], 5632
    $region17: #{model_forward.1} parent=1 // pred_fallthru
      _
    %s37 = sld [smem:[#allocation5]]
    %s38 = scalar_lea.vmem %s1, %s37
    %v39 = vld [vmem:[%s38] sm:$0x1]
    %vm40 = vcmask 253952
    %41 = vst.msk [vmem:[#allocation2] sm:$0x1] %vm40, %v39
    %s42 = sld [smem:[#allocation5 + $0x80]]
    %s43 = scalar_lea.vmem %s1, %s42
    %v44 = vld [vmem:[%s43] sm:$0x1]
    %45 = vst.msk [vmem:[#allocation2 + $0x1] sm:$0x1] %vm40, %v44
    %s46 = sld [smem:[#allocation5 + $0x1]]
    %s47 = scalar_lea.vmem %s1, %s46
    %v48 = vld [vmem:[%s47] sm:$0x1]
    %49 = vst.msk [vmem:[#allocation2 + $0x2] sm:$0x1] %vm40, %v48
    %s50 = sld [smem:[#allocation5 + $0x81]]
    %s51 = scalar_lea.vmem %s1, %s50
    %v52 = vld [vmem:[%s51] sm:$0x1]
    %53 = vst.msk [vmem:[#allocation2 + $0x3] sm:$0x1] %vm40, %v52
    %s54 = sld [smem:[#allocation5 + $0x2]]
    %s55 = scalar_lea.vmem %s1, %s54
    %v56 = vld [vmem:[%s55] sm:$0x1]
    %57 = vst.msk [vmem:[#allocation2 + $0x4] sm:$0x1] %vm40, %v56
    %s58 = sld [smem:[#allocation5 + $0x82]]
    %s59 = scalar_lea.vmem %s1, %s58
    %v60 = vld [vmem:[%s59] sm:$0x1]
    %61 = vst.msk [vmem:[#allocation2 + $0x5] sm:$0x1] %vm40, %v60
    %s62 = sld [smem:[#allocation5 + $0x3]]
    %s63 = scalar_lea.vmem %s1, %s62
    %v64 = vld [vmem:[%s63] sm:$0x1]
    %65 = vst.msk [vmem:[#allocation2 + $0x6] sm:$0x1] %vm40, %v64
    %s66 = sld [smem:[#allocation5 + $0x83]]
    %s67 = scalar_lea.vmem %s1, %s66
    %v68 = vld [vmem:[%s67] sm:$0x1]
    %69 = vst.msk [vmem:[#allocation2 + $0x7] sm:$0x1] %vm40, %v68
    %s70 = sld [smem:[#allocation5 + $0x4]]
    %s71 = scalar_lea.vmem %s1, %s70
    %v72 = vld [vmem:[%s71] sm:$0x1]
    %73 = vst.msk [vmem:[#allocation2 + $0x8] sm:$0x1] %vm40, %v72
    %s74 = sld [smem:[#allocation5 + $0x84]]
    %s75 = scalar_lea.vmem %s1, %s74
    %v76 = vld [vmem:[%s75] sm:$0x1]
    %77 = vst.msk [vmem:[#allocation2 + $0x9] sm:$0x1] %vm40, %v76
    %s78 = sld [smem:[#allocation5 + $0x5]]
    %s79 = scalar_lea.vmem %s1, %s78
    %v80 = vld [vmem:[%s79] sm:$0x1]
    %81 = vst.msk [vmem:[#allocation2 + $0xa] sm:$0x1] %vm40, %v80
    %s82 = sld [smem:[#allocation5 + $0x85]]
    %s83 = scalar_lea.vmem %s1, %s82
    %v84 = vld [vmem:[%s83] sm:$0x1]
    %85 = vst.msk [vmem:[#allocation2 + $0xb] sm:$0x1] %vm40, %v84
    %s86 = sld [smem:[#allocation5 + $0x6]]
    %s87 = scalar_lea.vmem %s1, %s86
    %v88 = vld [vmem:[%s87] sm:$0x1]
    %89 = vst.msk [vmem:[#allocation2 + $0xc] sm:$0x1] %vm40, %v88
    %s90 = sld [smem:[#allocation5 + $0x86]]
    %s91 = scalar_lea.vmem %s1, %s90
    %v92 = vld [vmem:[%s91] sm:$0x1]
    %93 = vst.msk [vmem:[#allocation2 + $0xd] sm:$0x1] %vm40, %v92
    %s94 = sld [smem:[#allocation5 + $0x7]]
    %s95 = scalar_lea.vmem %s1, %s94
    %v96 = vld [vmem:[%s95] sm:$0x1]
    %97 = vst.msk [vmem:[#allocation2 + $0xe] sm:$0x1] %vm40, %v96
    %s98 = sld [smem:[#allocation5 + $0x87]]
    %s99 = scalar_lea.vmem %s1, %s98
    %v100 = vld [vmem:[%s99] sm:$0x1]
    %101 = vst.msk [vmem:[#allocation2 + $0xf] sm:$0x1] %vm40, %v100
    %v102 = vld [vmem:[#allocation2] sm:$0xff]
    %v103 = vld [vmem:[#allocation2 + $0x8] sm:$0xff]
    %v104 = vld [vmem:[#allocation6] sm:$0xff]
    %v105 = vld [vmem:[#allocation6 + $0x8] sm:$0xff]
    %v106 = vld [vmem:[#allocation6 + $0x10] sm:$0xff]
    %v107 = vld [vmem:[#allocation6 + $0x18] sm:$0xff]
    %v108 = vld [vmem:[#allocation6 + $0x20] sm:$0xff]
    %v109 = vld [vmem:[#allocation6 + $0x28] sm:$0xff]
    %v110 = vld [vmem:[#allocation6 + $0x30] sm:$0xff]
    %v111 = vld [vmem:[#allocation6 + $0x38] sm:$0xff]
    %v112 = vpack.c.bf16 %v106, %v104
    %v113 = vpack.c.bf16 %v107, %v105
    %v114 = vpack.c.bf16 %v110, %v108
    %v115 = vpack.c.bf16 %v111, %v109
    %v116 = vld [vmem:[#allocation6 + $0x40] sm:$0xff]
    %v117 = vld [vmem:[#allocation6 + $0x48] sm:$0xff]
    %v118 = vld [vmem:[#allocation6 + $0x50] sm:$0xff]
    %v119 = vld [vmem:[#allocation6 + $0x58] sm:$0xff]
    %v120 = vld [vmem:[#allocation6 + $0x60] sm:$0xff]
    %v121 = vld [vmem:[#allocation6 + $0x68] sm:$0xff]
    %v122 = vld [vmem:[#allocation6 + $0x70] sm:$0xff]
    %v123 = vld [vmem:[#allocation6 + $0x78] sm:$0xff]
    %v124 = vpack.c.bf16 %v118, %v116
    %v125 = vpack.c.bf16 %v119, %v117
    %v126 = vpack.c.bf16 %v122, %v120
    %v127 = vpack.c.bf16 %v123, %v121
    %s128 = scalar_lea.vmem [#allocation6], 128
    %v129 = vld [vmem:[%s128] ss:$8 sm:$0x3]
    %v130 = vpack.c.bf16 %v103, %v102
    %v132 = vlaneseq
    %v133 = vshrl.u32 %v132, 7
    %v134 = vsub.s32 0, %v133
    %v135 = vrot.slane %v129, %v134
    %v136 = vlaneseq
    %v137 = vshrl.u32 %v136, 7
    %v138 = vsub.s32 1, %v137
    %v139 = vrot.slane %v129, %v138
    %vm142 = vcmask 261120
    %v144 = vsel %vm142, %v130, 0
    %146 = vmatprep.subr.bf16.mxu0 %v113
    %147 = vmatpush1.bf16.msra.mxu0 %v112
    %148 = vmatprep.subr.bf16.mxu0 %v115
    %149 = vmatpush1.bf16.msra.mxu0 %v114
    %150 = vmatprep.subr.bf16.mxu0 0
    %151 = vmatpush1.bf16.msra.mxu0 0
    %152 = vmatprep.subr.bf16.mxu0 0
    %153 = vmatpush1.bf16.msra.mxu0 0
    %154 = vmatprep.subr.bf16.mxu0 0
    %155 = vmatpush1.bf16.msra.mxu0 0
    %156 = vmatprep.subr.bf16.mxu0 0
    %157 = vmatpush1.bf16.msra.mxu0 0
    %158 = vmatprep.subr.bf16.mxu0 0
    %159 = vmatpush1.bf16.msra.mxu0 0
    %160 = vmatprep.subr.bf16.mxu0 0
    %161 = vmatpush1.bf16.msra.mxu0 0
    %162 = vmatprep.subr.bf16.mxu0 0
    %163 = vmatpush1.bf16.msra.mxu0 0
    %164 = vmatprep.subr.bf16.mxu0 0
    %165 = vmatpush1.bf16.msra.mxu0 0
    %166 = vmatprep.subr.bf16.mxu0 0
    %167 = vmatpush1.bf16.msra.mxu0 0
    %168 = vmatprep.subr.bf16.mxu0 0
    %169 = vmatpush1.bf16.msra.mxu0 0
    %170 = vmatprep.subr.bf16.mxu0 0
    %171 = vmatpush1.bf16.msra.mxu0 0
    %172 = vmatprep.subr.bf16.mxu0 0
    %173 = vmatpush1.bf16.msra.mxu0 0
    %174 = vmatprep.subr.bf16.mxu0 0
    %175 = vmatpush1.bf16.msra.mxu0 0
    %176 = vmatprep.subr.bf16.mxu0 0
    %177 = vmatpush1.bf16.msra.mxu0 0
    %178 = vmatprep.mubr.bf16.mxu0 0
    %179 = vmatmul.mubr.bf16.gmra.mrb[0].mxu0 %v144
    %v180 = vpop.f32.mrb[0].mxu0
    %v181 = vadd.f32 %v135, %v180
    %v182 = vpop.f32.mrb[0].mxu0
    %v183 = vadd.f32 %v139, %v182
    %v184 = vpop.f32.mrb[0].mxu0
    %v185 = vadd.f32 %v135, %v184
    %v186 = vpop.f32.mrb[0].mxu0
    %v187 = vadd.f32 %v139, %v186
    %188 = vdwg.mxu0
    %v190 = vrot.slane %v187, 4
    %vm192 = vcmask 1041408
    %v193 = vsel %vm192, %v181, %v190
    %v195 = vrot.slane %v181, 2
    %v197 = vrot.slane %v187, 2
    %v199 = vsel %vm192, %v195, %v197
    %v200 = vrot.slane %v181, 4
    %v202 = vsel %vm192, %v200, %v187
    %v203 = vrot.slane %v181, 6
    %v205 = vrot.slane %v187, 6
    %v207 = vsel %vm192, %v203, %v205
    %v209 = vrot.slane %v183, 4
    %v211 = vsel %vm192, %v185, %v209
    %v213 = vrot.slane %v185, 2
    %v215 = vrot.slane %v183, 2
    %v217 = vsel %vm192, %v213, %v215
    %v218 = vrot.slane %v185, 4
    %v220 = vsel %vm192, %v218, %v183
    %v221 = vrot.slane %v185, 6
    %v223 = vrot.slane %v183, 6
    %v225 = vsel %vm192, %v221, %v223
    %v226 = vlaneseq
    %v227 = vshrl.u32 %v226, 7
    %vm228 = vcmp.lt.s32.totalorder %v227, 2
    %v230 = vsel %vm142, 0, 0
    %232 = vmatprep.subr.bf16.mxu0 %v125
    %233 = vmatpush1.bf16.msra.mxu0 %v124
    %234 = vmatprep.subr.bf16.mxu0 %v127
    %235 = vmatpush1.bf16.msra.mxu0 %v126
    %236 = vmatprep.subr.bf16.mxu0 0
    %237 = vmatpush1.bf16.msra.mxu0 0
    %238 = vmatprep.subr.bf16.mxu0 0
    %239 = vmatpush1.bf16.msra.mxu0 0
    %240 = vmatprep.subr.bf16.mxu0 0
    %241 = vmatpush1.bf16.msra.mxu0 0
    %242 = vmatprep.subr.bf16.mxu0 0
    %243 = vmatpush1.bf16.msra.mxu0 0
    %244 = vmatprep.subr.bf16.mxu0 0
    %245 = vmatpush1.bf16.msra.mxu0 0
    %246 = vmatprep.subr.bf16.mxu0 0
    %247 = vmatpush1.bf16.msra.mxu0 0
    %248 = vmatprep.subr.bf16.mxu0 0
    %249 = vmatpush1.bf16.msra.mxu0 0
    %250 = vmatprep.subr.bf16.mxu0 0
    %251 = vmatpush1.bf16.msra.mxu0 0
    %252 = vmatprep.subr.bf16.mxu0 0
    %253 = vmatpush1.bf16.msra.mxu0 0
    %254 = vmatprep.subr.bf16.mxu0 0
    %255 = vmatpush1.bf16.msra.mxu0 0
    %256 = vmatprep.subr.bf16.mxu0 0
    %257 = vmatpush1.bf16.msra.mxu0 0
    %258 = vmatprep.subr.bf16.mxu0 0
    %259 = vmatpush1.bf16.msra.mxu0 0
    %260 = vmatprep.subr.bf16.mxu0 0
    %261 = vmatpush1.bf16.msra.mxu0 0
    %262 = vmatprep.subr.bf16.mxu0 0
    %263 = vmatpush1.bf16.msra.mxu0 0
    %264 = vmatprep.mubr.bf16.mxu0 0
    %265 = vmatmul.mubr.bf16.gmra.mrb[0].mxu0 %v230
    %v266 = vpop.f32.mrb[0].mxu0
    %v267 = vadd.f32 0.0, %v266
    %v268 = vpop.f32.mrb[0].mxu0
    %v269 = vadd.f32 0.0, %v268
    %v270 = vpop.f32.mrb[0].mxu0
    %v271 = vpop.f32.mrb[0].mxu0
    %272 = vdwg.mxu0
    %v273 = vsel %vm228, 1, 0
    %vm274 = vcmp.eq.s32.totalorder %v273, 1
    %v275 = vsel %vm274, %v267, %v269
    %v276 = vadd.f32 %v193, %v275
    %v277 = vxor.u32 %v276, 2147483648
    %v278 = vmul.f32 %v277, 1.442695
    %v279 = vpow.pop %v278
    %v280 = vadd.f32 %v279, 1.0
    %v281 = vrcp.pop %v280
    %v282 = vmul.f32 1.0, %v281
    %v283 = vtanh.pop %v276
    %v284 = vmul.f32 %v282, 0.0
    %286 = vrot.lane.b32.xlu0 %v283, 32
    %v287 = vpop.permute.xlu0 %286
    %v289 = vmul.f32 %v282, %v287
    %291 = vrot.lane.b32.xlu0 %v289, 32
    %v292 = vpop.permute.xlu0 %291
    %v294 = vadd.f32 %v284, %v292
    %v295 = vtanh.pop %v294
    %297 = vrot.lane.b32.xlu0 %v295, 32
    %v298 = vpop.permute.xlu0 %297
    %v300 = vmul.f32 %v282, %v298
    %302 = vrot.lane.b32.xlu0 %v300, 64
    %v303 = vpop.permute.xlu0 %302
    %vm305 = vcmask 254976
    %306 = vst.msk [vmem:[#allocation3] sm:$0x3] %vm305, %v303
    %307 = vrot.lane.b32.xlu0 %v300, 96
    %v308 = vpop.permute.xlu0 %307
    %vm310 = vcmask 519426
    %311 = vst.msk [vmem:[#allocation3 + $0xc] sm:$0xc] %vm310, %v308
    %v312 = vpack.c.bf16 %v300, %v300
    %314 = vrot.lane.b32.xlu0 %v312, 64
    %v315 = vpop.permute.xlu0 %314
    %v317 = vsel %vm142, %v315, 0
    %319 = vmatprep.subr.bf16.mxu0 %v125
    %320 = vmatpush1.bf16.msra.mxu0 %v124
    %321 = vmatprep.subr.bf16.mxu0 %v127
    %322 = vmatpush1.bf16.msra.mxu0 %v126
    %323 = vmatprep.subr.bf16.mxu0 0
    %324 = vmatpush1.bf16.msra.mxu0 0
    %325 = vmatprep.subr.bf16.mxu0 0
    %326 = vmatpush1.bf16.msra.mxu0 0
    %327 = vmatprep.subr.bf16.mxu0 0
    %328 = vmatpush1.bf16.msra.mxu0 0
    %329 = vmatprep.subr.bf16.mxu0 0
    %330 = vmatpush1.bf16.msra.mxu0 0
    %331 = vmatprep.subr.bf16.mxu0 0
    %332 = vmatpush1.bf16.msra.mxu0 0
    %333 = vmatprep.subr.bf16.mxu0 0
    %334 = vmatpush1.bf16.msra.mxu0 0
    %335 = vmatprep.subr.bf16.mxu0 0
    %336 = vmatpush1.bf16.msra.mxu0 0
    %337 = vmatprep.subr.bf16.mxu0 0
    %338 = vmatpush1.bf16.msra.mxu0 0
    %339 = vmatprep.subr.bf16.mxu0 0
    %340 = vmatpush1.bf16.msra.mxu0 0
    %341 = vmatprep.subr.bf16.mxu0 0
    %342 = vmatpush1.bf16.msra.mxu0 0
    %343 = vmatprep.subr.bf16.mxu0 0
    %344 = vmatpush1.bf16.msra.mxu0 0
    %345 = vmatprep.subr.bf16.mxu0 0
    %346 = vmatpush1.bf16.msra.mxu0 0
    %347 = vmatprep.subr.bf16.mxu0 0
    %348 = vmatpush1.bf16.msra.mxu0 0
    %349 = vmatprep.subr.bf16.mxu0 0
    %350 = vmatpush1.bf16.msra.mxu0 0
    %351 = vmatprep.mubr.bf16.mxu0 0
    %352 = vmatmul.mubr.bf16.gmra.mrb[0].mxu0 %v317
    %v353 = vpop.f32.mrb[0].mxu0
    %v354 = vadd.f32 0.0, %v353
    %v355 = vpop.f32.mrb[0].mxu0
    %v356 = vadd.f32 0.0, %v355
    %v357 = vpop.f32.mrb[0].mxu0
    %v358 = vpop.f32.mrb[0].mxu0
    %359 = vdwg.mxu0
    %v360 = vsel %vm274, %v354, %v356
    %v361 = vadd.f32 %v199, %v360
    %v362 = vxor.u32 %v361, 2147483648
    %v363 = vmul.f32 %v362, 1.442695
    %v364 = vpow.pop %v363
    %v365 = vadd.f32 %v364, 1.0
    %v366 = vrcp.pop %v365
    %v367 = vmul.f32 1.0, %v366
    %v368 = vtanh.pop %v361
    %v369 = vmul.f32 %v367, %v294
    %371 = vrot.lane.b32.xlu0 %v368, 32
    %v372 = vpop.permute.xlu0 %371
    %v374 = vmul.f32 %v367, %v372
    %376 = vrot.lane.b32.xlu0 %v374, 32
    %v377 = vpop.permute.xlu0 %376
    %v379 = vadd.f32 %v369, %v377
    %v380 = vtanh.pop %v379
    %382 = vrot.lane.b32.xlu0 %v380, 32
    %v383 = vpop.permute.xlu0 %382
    %v385 = vmul.f32 %v367, %v383
    %387 = vrot.lane.b32.xlu0 %v385, 64
    %v388 = vpop.permute.xlu0 %387
    %390 = vst.msk [vmem:[#allocation3 + $0x2] sm:$0x3] %vm305, %v388
    %391 = vrot.lane.b32.xlu0 %v385, 96
    %v392 = vpop.permute.xlu0 %391
    %394 = vst.msk [vmem:[#allocation3 + $0xa] sm:$0xc] %vm310, %v392
    %v395 = vpack.c.bf16 %v385, %v385
    %397 = vrot.lane.b32.xlu0 %v395, 64
    %v398 = vpop.permute.xlu0 %397
    %v400 = vsel %vm142, %v398, 0
    %402 = vmatprep.subr.bf16.mxu0 %v125
    %403 = vmatpush1.bf16.msra.mxu0 %v124
    %404 = vmatprep.subr.bf16.mxu0 %v127
    %405 = vmatpush1.bf16.msra.mxu0 %v126
    %406 = vmatprep.subr.bf16.mxu0 0
    %407 = vmatpush1.bf16.msra.mxu0 0
    %408 = vmatprep.subr.bf16.mxu0 0
    %409 = vmatpush1.bf16.msra.mxu0 0
    %410 = vmatprep.subr.bf16.mxu0 0
    %411 = vmatpush1.bf16.msra.mxu0 0
    %412 = vmatprep.subr.bf16.mxu0 0
    %413 = vmatpush1.bf16.msra.mxu0 0
    %414 = vmatprep.subr.bf16.mxu0 0
    %415 = vmatpush1.bf16.msra.mxu0 0
    %416 = vmatprep.subr.bf16.mxu0 0
    %417 = vmatpush1.bf16.msra.mxu0 0
    %418 = vmatprep.subr.bf16.mxu0 0
    %419 = vmatpush1.bf16.msra.mxu0 0
    %420 = vmatprep.subr.bf16.mxu0 0
    %421 = vmatpush1.bf16.msra.mxu0 0
    %422 = vmatprep.subr.bf16.mxu0 0
    %423 = vmatpush1.bf16.msra.mxu0 0
    %424 = vmatprep.subr.bf16.mxu0 0
    %425 = vmatpush1.bf16.msra.mxu0 0
    %426 = vmatprep.subr.bf16.mxu0 0
    %427 = vmatpush1.bf16.msra.mxu0 0
    %428 = vmatprep.subr.bf16.mxu0 0
    %429 = vmatpush1.bf16.msra.mxu0 0
    %430 = vmatprep.subr.bf16.mxu0 0
    %431 = vmatpush1.bf16.msra.mxu0 0
    %432 = vmatprep.subr.bf16.mxu0 0
    %433 = vmatpush1.bf16.msra.mxu0 0
    %434 = vmatprep.mubr.bf16.mxu0 0
    %435 = vmatmul.mubr.bf16.gmra.mrb[0].mxu0 %v400
    %v436 = vpop.f32.mrb[0].mxu0
    %v437 = vadd.f32 0.0, %v436
    %v438 = vpop.f32.mrb[0].mxu0
    %v439 = vadd.f32 0.0, %v438
    %v440 = vpop.f32.mrb[0].mxu0
    %v441 = vpop.f32.mrb[0].mxu0
    %442 = vdwg.mxu0
    %v443 = vsel %vm274, %v437, %v439
    %v444 = vadd.f32 %v202, %v443
    %v445 = vxor.u32 %v444, 2147483648
    %v446 = vmul.f32 %v445, 1.442695
    %v447 = vpow.pop %v446
    %v448 = vadd.f32 %v447, 1.0
    %v449 = vrcp.pop %v448
    %v450 = vmul.f32 1.0, %v449
    %v451 = vtanh.pop %v444
    %v452 = vmul.f32 %v450, %v379
    %454 = vrot.lane.b32.xlu0 %v451, 32
    %v455 = vpop.permute.xlu0 %454
    %v457 = vmul.f32 %v450, %v455
    %459 = vrot.lane.b32.xlu0 %v457, 32
    %v460 = vpop.permute.xlu0 %459
    %v462 = vadd.f32 %v452, %v460
    %v463 = vtanh.pop %v462
    %465 = vrot.lane.b32.xlu0 %v463, 32
    %v466 = vpop.permute.xlu0 %465
    %v468 = vmul.f32 %v450, %v466
    %470 = vrot.lane.b32.xlu0 %v468, 64
    %v471 = vpop.permute.xlu0 %470
    %473 = vst.msk [vmem:[#allocation3 + $0x4] sm:$0x3] %vm305, %v471
    %474 = vrot.lane.b32.xlu0 %v468, 96
    %v475 = vpop.permute.xlu0 %474
    %477 = vst.msk [vmem:[#allocation3 + $0x8] sm:$0xc] %vm310, %v475
    %v478 = vpack.c.bf16 %v468, %v468
    %480 = vrot.lane.b32.xlu0 %v478, 64
    %v481 = vpop.permute.xlu0 %480
    %v483 = vsel %vm142, %v481, 0
    %485 = vmatprep.subr.bf16.mxu0 %v125
    %486 = vmatpush1.bf16.msra.mxu0 %v124
    %487 = vmatprep.subr.bf16.mxu0 %v127
    %488 = vmatpush1.bf16.msra.mxu0 %v126
    %489 = vmatprep.subr.bf16.mxu0 0
    %490 = vmatpush1.bf16.msra.mxu0 0
    %491 = vmatprep.subr.bf16.mxu0 0
    %492 = vmatpush1.bf16.msra.mxu0 0
    %493 = vmatprep.subr.bf16.mxu0 0
    %494 = vmatpush1.bf16.msra.mxu0 0
    %495 = vmatprep.subr.bf16.mxu0 0
    %496 = vmatpush1.bf16.msra.mxu0 0
    %497 = vmatprep.subr.bf16.mxu0 0
    %498 = vmatpush1.bf16.msra.mxu0 0
    %499 = vmatprep.subr.bf16.mxu0 0
    %500 = vmatpush1.bf16.msra.mxu0 0
    %501 = vmatprep.subr.bf16.mxu0 0
    %502 = vmatpush1.bf16.msra.mxu0 0
    %503 = vmatprep.subr.bf16.mxu0 0
    %504 = vmatpush1.bf16.msra.mxu0 0
    %505 = vmatprep.subr.bf16.mxu0 0
    %506 = vmatpush1.bf16.msra.mxu0 0
    %507 = vmatprep.subr.bf16.mxu0 0
    %508 = vmatpush1.bf16.msra.mxu0 0
    %509 = vmatprep.subr.bf16.mxu0 0
    %510 = vmatpush1.bf16.msra.mxu0 0
    %511 = vmatprep.subr.bf16.mxu0 0
    %512 = vmatpush1.bf16.msra.mxu0 0
    %513 = vmatprep.subr.bf16.mxu0 0
    %514 = vmatpush1.bf16.msra.mxu0 0
    %515 = vmatprep.subr.bf16.mxu0 0
    %516 = vmatpush1.bf16.msra.mxu0 0
    %517 = vmatprep.mubr.bf16.mxu0 0
    %518 = vmatmul.mubr.bf16.gmra.mrb[0].mxu0 %v483
    %v519 = vpop.f32.mrb[0].mxu0
    %v520 = vadd.f32 0.0, %v519
    %v521 = vpop.f32.mrb[0].mxu0
    %v522 = vadd.f32 0.0, %v521
    %v523 = vpop.f32.mrb[0].mxu0
    %v524 = vpop.f32.mrb[0].mxu0
    %525 = vdwg.mxu0
    %v526 = vsel %vm274, %v520, %v522
    %v527 = vadd.f32 %v207, %v526
    %v528 = vxor.u32 %v527, 2147483648
    %v529 = vmul.f32 %v528, 1.442695
    %v530 = vpow.pop %v529
    %v531 = vadd.f32 %v530, 1.0
    %v532 = vrcp.pop %v531
    %v533 = vmul.f32 1.0, %v532
    %v534 = vtanh.pop %v527
    %v535 = vmul.f32 %v533, %v462
    %537 = vrot.lane.b32.xlu0 %v534, 32
    %v538 = vpop.permute.xlu0 %537
    %v540 = vmul.f32 %v533, %v538
    %542 = vrot.lane.b32.xlu0 %v540, 32
    %v543 = vpop.permute.xlu0 %542
    %v545 = vadd.f32 %v535, %v543
    %v546 = vtanh.pop %v545
    %548 = vrot.lane.b32.xlu0 %v546, 32
    %v549 = vpop.permute.xlu0 %548
    %v551 = vmul.f32 %v533, %v549
    %553 = vrot.lane.b32.xlu0 %v551, 64
    %v554 = vpop.permute.xlu0 %553
    %556 = vst.msk [vmem:[#allocation3 + $0x6] sm:$0x3] %vm305, %v554
    %557 = vrot.lane.b32.xlu0 %v551, 96
    %v558 = vpop.permute.xlu0 %557
    %560 = vst.msk [vmem:[#allocation3 + $0x6] sm:$0xc] %vm310, %v558
    %v561 = vpack.c.bf16 %v551, %v551
    %563 = vrot.lane.b32.xlu0 %v561, 64
    %v564 = vpop.permute.xlu0 %563
    %v566 = vsel %vm142, %v564, 0
    %568 = vmatprep.subr.bf16.mxu0 %v125
    %569 = vmatpush1.bf16.msra.mxu0 %v124
    %570 = vmatprep.subr.bf16.mxu0 %v127
    %571 = vmatpush1.bf16.msra.mxu0 %v126
    %572 = vmatprep.subr.bf16.mxu0 0
    %573 = vmatpush1.bf16.msra.mxu0 0
    %574 = vmatprep.subr.bf16.mxu0 0
    %575 = vmatpush1.bf16.msra.mxu0 0
    %576 = vmatprep.subr.bf16.mxu0 0
    %577 = vmatpush1.bf16.msra.mxu0 0
    %578 = vmatprep.subr.bf16.mxu0 0
    %579 = vmatpush1.bf16.msra.mxu0 0
    %580 = vmatprep.subr.bf16.mxu0 0
    %581 = vmatpush1.bf16.msra.mxu0 0
    %582 = vmatprep.subr.bf16.mxu0 0
    %583 = vmatpush1.bf16.msra.mxu0 0
    %584 = vmatprep.subr.bf16.mxu0 0
    %585 = vmatpush1.bf16.msra.mxu0 0
    %586 = vmatprep.subr.bf16.mxu0 0
    %587 = vmatpush1.bf16.msra.mxu0 0
    %588 = vmatprep.subr.bf16.mxu0 0
    %589 = vmatpush1.bf16.msra.mxu0 0
    %590 = vmatprep.subr.bf16.mxu0 0
    %591 = vmatpush1.bf16.msra.mxu0 0
    %592 = vmatprep.subr.bf16.mxu0 0
    %593 = vmatpush1.bf16.msra.mxu0 0
    %594 = vmatprep.subr.bf16.mxu0 0
    %595 = vmatpush1.bf16.msra.mxu0 0
    %596 = vmatprep.subr.bf16.mxu0 0
    %597 = vmatpush1.bf16.msra.mxu0 0
    %598 = vmatprep.subr.bf16.mxu0 0
    %599 = vmatpush1.bf16.msra.mxu0 0
    %600 = vmatprep.mubr.bf16.mxu0 0
    %601 = vmatmul.mubr.bf16.gmra.mrb[0].mxu0 %v566
    %v602 = vpop.f32.mrb[0].mxu0
    %v603 = vadd.f32 0.0, %v602
    %v604 = vpop.f32.mrb[0].mxu0
    %v605 = vadd.f32 0.0, %v604
    %v606 = vpop.f32.mrb[0].mxu0
    %v607 = vpop.f32.mrb[0].mxu0
    %608 = vdwg.mxu0
    %v609 = vsel %vm274, %v603, %v605
    %v610 = vadd.f32 %v211, %v609
    %v611 = vxor.u32 %v610, 2147483648
    %v612 = vmul.f32 %v611, 1.442695
    %v613 = vpow.pop %v612
    %v614 = vadd.f32 %v613, 1.0
    %v615 = vrcp.pop %v614
    %v616 = vmul.f32 1.0, %v615
    %v617 = vtanh.pop %v610
    %v618 = vmul.f32 %v616, %v545
    %620 = vrot.lane.b32.xlu0 %v617, 32
    %v621 = vpop.permute.xlu0 %620
    %v623 = vmul.f32 %v616, %v621
    %625 = vrot.lane.b32.xlu0 %v623, 32
    %v626 = vpop.permute.xlu0 %625
    %v628 = vadd.f32 %v618, %v626
    %v629 = vtanh.pop %v628
    %631 = vrot.lane.b32.xlu0 %v629, 32
    %v632 = vpop.permute.xlu0 %631
    %v634 = vmul.f32 %v616, %v632
    %636 = vrot.lane.b32.xlu0 %v634, 64
    %v637 = vpop.permute.xlu0 %636
    %639 = vst.msk [vmem:[#allocation3 + $0x8] sm:$0x3] %vm305, %v637
    %640 = vrot.lane.b32.xlu0 %v634, 96
    %v641 = vpop.permute.xlu0 %640
    %643 = vst.msk [vmem:[#allocation3 + $0x4] sm:$0xc] %vm310, %v641
    %v644 = vpack.c.bf16 %v634, %v634
    %646 = vrot.lane.b32.xlu0 %v644, 64
    %v647 = vpop.permute.xlu0 %646
    %v649 = vsel %vm142, %v647, 0
    %651 = vmatprep.subr.bf16.mxu0 %v125
    %652 = vmatpush1.bf16.msra.mxu0 %v124
    %653 = vmatprep.subr.bf16.mxu0 %v127
    %654 = vmatpush1.bf16.msra.mxu0 %v126
    %655 = vmatprep.subr.bf16.mxu0 0
    %656 = vmatpush1.bf16.msra.mxu0 0
    %657 = vmatprep.subr.bf16.mxu0 0
    %658 = vmatpush1.bf16.msra.mxu0 0
    %659 = vmatprep.subr.bf16.mxu0 0
    %660 = vmatpush1.bf16.msra.mxu0 0
    %661 = vmatprep.subr.bf16.mxu0 0
    %662 = vmatpush1.bf16.msra.mxu0 0
    %663 = vmatprep.subr.bf16.mxu0 0
    %664 = vmatpush1.bf16.msra.mxu0 0
    %665 = vmatprep.subr.bf16.mxu0 0
    %666 = vmatpush1.bf16.msra.mxu0 0
    %667 = vmatprep.subr.bf16.mxu0 0
    %668 = vmatpush1.bf16.msra.mxu0 0
    %669 = vmatprep.subr.bf16.mxu0 0
    %670 = vmatpush1.bf16.msra.mxu0 0
    %671 = vmatprep.subr.bf16.mxu0 0
    %672 = vmatpush1.bf16.msra.mxu0 0
    %673 = vmatprep.subr.bf16.mxu0 0
    %674 = vmatpush1.bf16.msra.mxu0 0
    %675 = vmatprep.subr.bf16.mxu0 0
    %676 = vmatpush1.bf16.msra.mxu0 0
    %677 = vmatprep.subr.bf16.mxu0 0
    %678 = vmatpush1.bf16.msra.mxu0 0
    %679 = vmatprep.subr.bf16.mxu0 0
    %680 = vmatpush1.bf16.msra.mxu0 0
    %681 = vmatprep.subr.bf16.mxu0 0
    %682 = vmatpush1.bf16.msra.mxu0 0
    %683 = vmatprep.mubr.bf16.mxu0 0
    %684 = vmatmul.mubr.bf16.gmra.mrb[0].mxu0 %v649
    %v685 = vpop.f32.mrb[0].mxu0
    %v686 = vadd.f32 0.0, %v685
    %v687 = vpop.f32.mrb[0].mxu0
    %v688 = vadd.f32 0.0, %v687
    %v689 = vpop.f32.mrb[0].mxu0
    %v690 = vpop.f32.mrb[0].mxu0
    %691 = vdwg.mxu0
    %v692 = vsel %vm274, %v686, %v688
    %v693 = vadd.f32 %v217, %v692
    %v694 = vxor.u32 %v693, 2147483648
    %v695 = vmul.f32 %v694, 1.442695
    %v696 = vpow.pop %v695
    %v697 = vadd.f32 %v696, 1.0
    %v698 = vrcp.pop %v697
    %v699 = vmul.f32 1.0, %v698
    %v700 = vtanh.pop %v693
    %v701 = vmul.f32 %v699, %v628
    %703 = vrot.lane.b32.xlu0 %v700, 32
    %v704 = vpop.permute.xlu0 %703
    %v706 = vmul.f32 %v699, %v704
    %708 = vrot.lane.b32.xlu0 %v706, 32
    %v709 = vpop.permute.xlu0 %708
    %v711 = vadd.f32 %v701, %v709
    %v712 = vtanh.pop %v711
    %714 = vrot.lane.b32.xlu0 %v712, 32
    %v715 = vpop.permute.xlu0 %714
    %v717 = vmul.f32 %v699, %v715
    %719 = vrot.lane.b32.xlu0 %v717, 64
    %v720 = vpop.permute.xlu0 %719
    %722 = vst.msk [vmem:[#allocation3 + $0xa] sm:$0x3] %vm305, %v720
    %723 = vrot.lane.b32.xlu0 %v717, 96
    %v724 = vpop.permute.xlu0 %723
    %726 = vst.msk [vmem:[#allocation3 + $0x2] sm:$0xc] %vm310, %v724
    %v727 = vpack.c.bf16 %v717, %v717
    %729 = vrot.lane.b32.xlu0 %v727, 64
    %v730 = vpop.permute.xlu0 %729
    %v732 = vsel %vm142, %v730, 0
    %734 = vmatprep.subr.bf16.mxu0 %v125
    %735 = vmatpush1.bf16.msra.mxu0 %v124
    %736 = vmatprep.subr.bf16.mxu0 %v127
    %737 = vmatpush1.bf16.msra.mxu0 %v126
    %738 = vmatprep.subr.bf16.mxu0 0
    %739 = vmatpush1.bf16.msra.mxu0 0
    %740 = vmatprep.subr.bf16.mxu0 0
    %741 = vmatpush1.bf16.msra.mxu0 0
    %742 = vmatprep.subr.bf16.mxu0 0
    %743 = vmatpush1.bf16.msra.mxu0 0
    %744 = vmatprep.subr.bf16.mxu0 0
    %745 = vmatpush1.bf16.msra.mxu0 0
    %746 = vmatprep.subr.bf16.mxu0 0
    %747 = vmatpush1.bf16.msra.mxu0 0
    %748 = vmatprep.subr.bf16.mxu0 0
    %749 = vmatpush1.bf16.msra.mxu0 0
    %750 = vmatprep.subr.bf16.mxu0 0
    %751 = vmatpush1.bf16.msra.mxu0 0
    %752 = vmatprep.subr.bf16.mxu0 0
    %753 = vmatpush1.bf16.msra.mxu0 0
    %754 = vmatprep.subr.bf16.mxu0 0
    %755 = vmatpush1.bf16.msra.mxu0 0
    %756 = vmatprep.subr.bf16.mxu0 0
    %757 = vmatpush1.bf16.msra.mxu0 0
    %758 = vmatprep.subr.bf16.mxu0 0
    %759 = vmatpush1.bf16.msra.mxu0 0
    %760 = vmatprep.subr.bf16.mxu0 0
    %761 = vmatpush1.bf16.msra.mxu0 0
    %762 = vmatprep.subr.bf16.mxu0 0
    %763 = vmatpush1.bf16.msra.mxu0 0
    %764 = vmatprep.subr.bf16.mxu0 0
    %765 = vmatpush1.bf16.msra.mxu0 0
    %766 = vmatprep.mubr.bf16.mxu0 0
    %767 = vmatmul.mubr.bf16.gmra.mrb[0].mxu0 %v732
    %v768 = vpop.f32.mrb[0].mxu0
    %v769 = vadd.f32 0.0, %v768
    %v770 = vpop.f32.mrb[0].mxu0
    %v771 = vadd.f32 0.0, %v770
    %v772 = vpop.f32.mrb[0].mxu0
    %v773 = vpop.f32.mrb[0].mxu0
    %774 = vdwg.mxu0
    %v775 = vsel %vm274, %v769, %v771
    %v776 = vadd.f32 %v220, %v775
    %v777 = vxor.u32 %v776, 2147483648
    %v778 = vmul.f32 %v777, 1.442695
    %v779 = vpow.pop %v778
    %v780 = vadd.f32 %v779, 1.0
    %v781 = vrcp.pop %v780
    %v782 = vmul.f32 1.0, %v781
    %v783 = vtanh.pop %v776
    %v784 = vmul.f32 %v782, %v711
    %786 = vrot.lane.b32.xlu0 %v783, 32
    %v787 = vpop.permute.xlu0 %786
    %v789 = vmul.f32 %v782, %v787
    %791 = vrot.lane.b32.xlu0 %v789, 32
    %v792 = vpop.permute.xlu0 %791
    %v794 = vadd.f32 %v784, %v792
    %v795 = vtanh.pop %v794
    %797 = vrot.lane.b32.xlu0 %v795, 32
    %v798 = vpop.permute.xlu0 %797
    %v800 = vmul.f32 %v782, %v798
    %802 = vrot.lane.b32.xlu0 %v800, 64
    %v803 = vpop.permute.xlu0 %802
    %805 = vst.msk [vmem:[#allocation3 + $0xc] sm:$0x3] %vm305, %v803
    %806 = vrot.lane.b32.xlu0 %v800, 96
    %v807 = vpop.permute.xlu0 %806
    %809 = vst.msk [vmem:[#allocation3] sm:$0xc] %vm310, %v807
    %v810 = vpack.c.bf16 %v800, %v800
    %812 = vrot.lane.b32.xlu0 %v810, 64
    %v813 = vpop.permute.xlu0 %812
    %v815 = vsel %vm142, %v813, 0
    %817 = vmatprep.subr.bf16.mxu0 %v125
    %818 = vmatpush1.bf16.msra.mxu0 %v124
    %819 = vmatprep.subr.bf16.mxu0 %v127
    %820 = vmatpush1.bf16.msra.mxu0 %v126
    %821 = vmatprep.subr.bf16.mxu0 0
    %822 = vmatpush1.bf16.msra.mxu0 0
    %823 = vmatprep.subr.bf16.mxu0 0
    %824 = vmatpush1.bf16.msra.mxu0 0
    %825 = vmatprep.subr.bf16.mxu0 0
    %826 = vmatpush1.bf16.msra.mxu0 0
    %827 = vmatprep.subr.bf16.mxu0 0
    %828 = vmatpush1.bf16.msra.mxu0 0
    %829 = vmatprep.subr.bf16.mxu0 0
    %830 = vmatpush1.bf16.msra.mxu0 0
    %831 = vmatprep.subr.bf16.mxu0 0
    %832 = vmatpush1.bf16.msra.mxu0 0
    %833 = vmatprep.subr.bf16.mxu0 0
    %834 = vmatpush1.bf16.msra.mxu0 0
    %835 = vmatprep.subr.bf16.mxu0 0
    %836 = vmatpush1.bf16.msra.mxu0 0
    %837 = vmatprep.subr.bf16.mxu0 0
    %838 = vmatpush1.bf16.msra.mxu0 0
    %839 = vmatprep.subr.bf16.mxu0 0
    %840 = vmatpush1.bf16.msra.mxu0 0
    %841 = vmatprep.subr.bf16.mxu0 0
    %842 = vmatpush1.bf16.msra.mxu0 0
    %843 = vmatprep.subr.bf16.mxu0 0
    %844 = vmatpush1.bf16.msra.mxu0 0
    %845 = vmatprep.subr.bf16.mxu0 0
    %846 = vmatpush1.bf16.msra.mxu0 0
    %847 = vmatprep.subr.bf16.mxu0 0
    %848 = vmatpush1.bf16.msra.mxu0 0
    %849 = vmatprep.mubr.bf16.mxu0 0
    %850 = vmatmul.mubr.bf16.gmra.mrb[0].mxu0 %v815
    %v851 = vpop.f32.mrb[0].mxu0
    %v852 = vadd.f32 0.0, %v851
    %v853 = vpop.f32.mrb[0].mxu0
    %v854 = vadd.f32 0.0, %v853
    %v855 = vpop.f32.mrb[0].mxu0
    %v856 = vpop.f32.mrb[0].mxu0
    %857 = vdwg.mxu0
    %v858 = vsel %vm274, %v852, %v854
    %v859 = vadd.f32 %v225, %v858
    %v860 = vxor.u32 %v859, 2147483648
    %v861 = vmul.f32 %v860, 1.442695
    %v862 = vpow.pop %v861
    %v863 = vadd.f32 %v862, 1.0
    %v864 = vrcp.pop %v863
    %v865 = vmul.f32 1.0, %v864
    %v866 = vtanh.pop %v859
    %v867 = vmul.f32 %v865, %v794
    %869 = vrot.lane.b32.xlu0 %v866, 32
    %v870 = vpop.permute.xlu0 %869
    %v872 = vmul.f32 %v865, %v870
    %874 = vrot.lane.b32.xlu0 %v872, 32
    %v875 = vpop.permute.xlu0 %874
    %v877 = vadd.f32 %v867, %v875
    %v878 = vtanh.pop %v877
    %880 = vrot.lane.b32.xlu0 %v878, 32
    %v881 = vpop.permute.xlu0 %880
    %v883 = vmul.f32 %v865, %v881
    %885 = vrot.lane.b32.xlu0 %v883, 64
    %v886 = vpop.permute.xlu0 %885
    %888 = vst.msk [vmem:[#allocation3 + $0xe] sm:$0x3] %vm305, %v886
    %889 = vrot.lane.b32.xlu0 %v883, 96
    %v890 = vpop.permute.xlu0 %889
    %892 = vst.msk [vmem:[#allocation3 - $0x2] sm:$0xc] %vm310, %v890
    %v893 = vld [vmem:[#allocation3] sm:$0xff]
    %v894 = vld [vmem:[#allocation3 + $0x8] sm:$0xff]
    %v895 = vld [vmem:[#allocation6 + $0x90] sm:$0xff]
    %v896 = vld [vmem:[#allocation6 + $0x98] sm:$0xff]
    %v897 = vld [vmem:[#allocation6 + $0xa0] sm:$0xff]
    %v898 = vld [vmem:[#allocation6 + $0xa8] sm:$0xff]
    %v899 = vld [vmem:[#allocation6 + $0xb0] sm:$0xff]
    %v900 = vld [vmem:[#allocation6 + $0xb8] sm:$0xff]
    %v901 = vld [vmem:[#allocation6 + $0xc0] sm:$0xff]
    %v902 = vld [vmem:[#allocation6 + $0xc8] sm:$0xff]
    %v903 = vld [vmem:[#allocation6 + $0xd0] sm:$0xff]
    %v904 = vld [vmem:[#allocation6 + $0xd8] sm:$0xff]
    %v905 = vld [vmem:[#allocation6 + $0xe0] sm:$0xff]
    %v906 = vld [vmem:[#allocation6 + $0xe8] sm:$0xff]
    %v907 = vld [vmem:[#allocation6 + $0xf0] sm:$0xff]
    %v908 = vld [vmem:[#allocation6 + $0xf8] sm:$0xff]
    %v909 = vld [vmem:[#allocation6 + $0x100] sm:$0xff]
    %v910 = vld [vmem:[#allocation6 + $0x108] sm:$0xff]
    %v911 = vpack.c.bf16 %v897, %v895
    %v912 = vpack.c.bf16 %v898, %v896
    %v913 = vpack.c.bf16 %v901, %v899
    %v914 = vpack.c.bf16 %v902, %v900
    %v915 = vpack.c.bf16 %v905, %v903
    %v916 = vpack.c.bf16 %v906, %v904
    %v917 = vpack.c.bf16 %v909, %v907
    %v918 = vpack.c.bf16 %v910, %v908
    %v919 = vld [vmem:[#allocation6 + $0x110] sm:$0xff]
    %v920 = vld [vmem:[#allocation6 + $0x120] sm:$0xff]
    %v921 = vld [vmem:[#allocation6 + $0x130] sm:$0xff]
    %v922 = vld [vmem:[#allocation6 + $0x140] sm:$0xff]
    %v923 = vpack.c.bf16 %v920, %v919
    %v924 = vpack.c.bf16 %v922, %v921
    %s925 = scalar_lea.vmem [#allocation6], 336
    %v926 = vld [vmem:[%s925] ss:$8 sm:$0x3]
    %v927 = vpack.c.bf16 %v894, %v893
    %v929 = vlaneseq
    %v930 = vshrl.u32 %v929, 7
    %v931 = vsub.s32 0, %v930
    %v932 = vrot.slane %v926, %v931
    %v933 = vlaneseq
    %v934 = vshrl.u32 %v933, 7
    %v935 = vsub.s32 1, %v934
    %v936 = vrot.slane %v926, %v935
    %vm939 = vcmask 523264
    %v941 = vsel %vm939, %v927, 0
    %943 = vmatprep.subr.bf16.mxu0 %v912
    %944 = vmatpush1.bf16.msra.mxu0 %v911
    %945 = vmatprep.subr.bf16.mxu0 %v914
    %946 = vmatpush1.bf16.msra.mxu0 %v913
    %947 = vmatprep.subr.bf16.mxu0 %v916
    %948 = vmatpush1.bf16.msra.mxu0 %v915
    %949 = vmatprep.subr.bf16.mxu0 %v918
    %950 = vmatpush1.bf16.msra.mxu0 %v917
    %951 = vmatprep.subr.bf16.mxu0 0
    %952 = vmatpush1.bf16.msra.mxu0 0
    %953 = vmatprep.subr.bf16.mxu0 0
    %954 = vmatpush1.bf16.msra.mxu0 0
    %955 = vmatprep.subr.bf16.mxu0 0
    %956 = vmatpush1.bf16.msra.mxu0 0
    %957 = vmatprep.subr.bf16.mxu0 0
    %958 = vmatpush1.bf16.msra.mxu0 0
    %959 = vmatprep.subr.bf16.mxu0 0
    %960 = vmatpush1.bf16.msra.mxu0 0
    %961 = vmatprep.subr.bf16.mxu0 0
    %962 = vmatpush1.bf16.msra.mxu0 0
    %963 = vmatprep.subr.bf16.mxu0 0
    %964 = vmatpush1.bf16.msra.mxu0 0
    %965 = vmatprep.subr.bf16.mxu0 0
    %966 = vmatpush1.bf16.msra.mxu0 0
    %967 = vmatprep.subr.bf16.mxu0 0
    %968 = vmatpush1.bf16.msra.mxu0 0
    %969 = vmatprep.subr.bf16.mxu0 0
    %970 = vmatpush1.bf16.msra.mxu0 0
    %971 = vmatprep.subr.bf16.mxu0 0
    %972 = vmatpush1.bf16.msra.mxu0 0
    %973 = vmatprep.subr.bf16.mxu0 0
    %974 = vmatpush1.bf16.msra.mxu0 0
    %975 = vmatprep.mubr.bf16.mxu0 0
    %976 = vmatmul.mubr.bf16.gmra.mrb[0].mxu0 %v941
    %v977 = vpop.f32.mrb[0].mxu0
    %v978 = vadd.f32 %v932, %v977
    %v979 = vpop.f32.mrb[0].mxu0
    %v980 = vpop.f32.mrb[0].mxu0
    %v981 = vadd.f32 %v932, %v980
    %v982 = vpop.f32.mrb[0].mxu0
    %v983 = vadd.f32 %v936, %v982
    %984 = vdwg.mxu0
    %v985 = vxor.u32 %v983, 2147483648
    %v986 = vmul.f32 %v985, 1.442695
    %v987 = vpow.pop %v986
    %v988 = vadd.f32 %v987, 1.0
    %v989 = vrcp.pop %v988
    %v990 = vmul.f32 1.0, %v989
    %v991 = vtanh.pop %v983
    %v992 = vmul.f32 %v990, 0.0
    %994 = vrot.lane.b32.xlu0 %v991, 32
    %v995 = vpop.permute.xlu0 %994
    %v997 = vmul.f32 %v990, %v995
    %999 = vrot.lane.b32.xlu0 %v997, 32
    %v1000 = vpop.permute.xlu0 %999
    %v1002 = vadd.f32 %v992, %v1000
    %v1003 = vtanh.pop %v1002
    %1005 = vrot.lane.b32.xlu0 %v1003, 32
    %v1006 = vpop.permute.xlu0 %1005
    %v1008 = vmul.f32 %v990, %v1006
    %1009 = vmatprep.subr.bf16.mxu0 0
    %1010 = vmatpush1.bf16.msra.mxu0 %v923
    %1011 = vmatprep.subr.bf16.mxu0 0
    %1012 = vmatpush1.bf16.msra.mxu0 %v924
    %1013 = vmatprep.subr.bf16.mxu0 0
    %1014 = vmatpush1.bf16.msra.mxu0 0
    %1015 = vmatprep.subr.bf16.mxu0 0
    %1016 = vmatpush1.bf16.msra.mxu0 0
    %1017 = vmatprep.subr.bf16.mxu0 0
    %1018 = vmatpush1.bf16.msra.mxu0 0
    %1019 = vmatprep.subr.bf16.mxu0 0
    %1020 = vmatpush1.bf16.msra.mxu0 0
    %1021 = vmatprep.subr.bf16.mxu0 0
    %1022 = vmatpush1.bf16.msra.mxu0 0
    %1023 = vmatprep.subr.bf16.mxu0 0
    %1024 = vmatpush1.bf16.msra.mxu0 0
    %1025 = vmatprep.subr.bf16.mxu0 0
    %1026 = vmatpush1.bf16.msra.mxu0 0
    %1027 = vmatprep.subr.bf16.mxu0 0
    %1028 = vmatpush1.bf16.msra.mxu0 0
    %1029 = vmatprep.subr.bf16.mxu0 0
    %1030 = vmatpush1.bf16.msra.mxu0 0
    %1031 = vmatprep.subr.bf16.mxu0 0
    %1032 = vmatpush1.bf16.msra.mxu0 0
    %1033 = vmatprep.subr.bf16.mxu0 0
    %1034 = vmatpush1.bf16.msra.mxu0 0
    %1035 = vmatprep.subr.bf16.mxu0 0
    %1036 = vmatpush1.bf16.msra.mxu0 0
    %1037 = vmatprep.subr.bf16.mxu0 0
    %1038 = vmatpush1.bf16.msra.mxu0 0
    %1039 = vmatprep.subr.bf16.mxu0 0
    %1040 = vmatpush1.bf16.msra.mxu0 0
    %1041 = vmatprep.mubr.bf16.mxu0 0
    %1042 = vmatmul.mubr.bf16.gmra.mrb[0].mxu0 %v230
    %v1043 = vpop.f32.mrb[0].mxu0
    %v1044 = vadd.f32 0.0, %v1043
    %v1045 = vpop.f32.mrb[0].mxu0
    %v1046 = vpop.f32.mrb[0].mxu0
    %v1047 = vpop.f32.mrb[0].mxu0
    %1048 = vdwg.mxu0
    %v1049 = vadd.f32 %v978, %v1044
    %v1050 = vxor.u32 %v1049, 2147483648
    %v1051 = vmul.f32 %v1050, 1.442695
    %v1052 = vpow.pop %v1051
    %v1053 = vadd.f32 %v1052, 1.0
    %v1054 = vrcp.pop %v1053
    %v1055 = vmul.f32 1.0, %v1054
    %v1056 = vtanh.pop %v1049
    %v1057 = vmul.f32 %v1055, 0.0
    %1059 = vrot.lane.b32.xlu0 %v1056, 32
    %v1060 = vpop.permute.xlu0 %1059
    %v1062 = vmul.f32 %v1055, %v1060
    %1064 = vrot.lane.b32.xlu0 %v1062, 32
    %v1065 = vpop.permute.xlu0 %1064
    %v1067 = vadd.f32 %v1057, %v1065
    %v1068 = vtanh.pop %v1067
    %1070 = vrot.lane.b32.xlu0 %v1068, 32
    %v1071 = vpop.permute.xlu0 %1070
    %v1073 = vmul.f32 %v1055, %v1071
    %v1074 = vpack.c.bf16 %v1073, %v1073
    %1076 = vrot.lane.b32.xlu0 %v1074, 64
    %v1077 = vpop.permute.xlu0 %1076
    %v1079 = vsel %vm142, %v1077, 0
    %1081 = vmatprep.subr.bf16.mxu0 0
    %1082 = vmatpush1.bf16.msra.mxu0 %v923
    %1083 = vmatprep.subr.bf16.mxu0 0
    %1084 = vmatpush1.bf16.msra.mxu0 %v924
    %1085 = vmatprep.subr.bf16.mxu0 0
    %1086 = vmatpush1.bf16.msra.mxu0 0
    %1087 = vmatprep.subr.bf16.mxu0 0
    %1088 = vmatpush1.bf16.msra.mxu0 0
    %1089 = vmatprep.subr.bf16.mxu0 0
    %1090 = vmatpush1.bf16.msra.mxu0 0
    %1091 = vmatprep.subr.bf16.mxu0 0
    %1092 = vmatpush1.bf16.msra.mxu0 0
    %1093 = vmatprep.subr.bf16.mxu0 0
    %1094 = vmatpush1.bf16.msra.mxu0 0
    %1095 = vmatprep.subr.bf16.mxu0 0
    %1096 = vmatpush1.bf16.msra.mxu0 0
    %1097 = vmatprep.subr.bf16.mxu0 0
    %1098 = vmatpush1.bf16.msra.mxu0 0
    %1099 = vmatprep.subr.bf16.mxu0 0
    %1100 = vmatpush1.bf16.msra.mxu0 0
    %1101 = vmatprep.subr.bf16.mxu0 0
    %1102 = vmatpush1.bf16.msra.mxu0 0
    %1103 = vmatprep.subr.bf16.mxu0 0
    %1104 = vmatpush1.bf16.msra.mxu0 0
    %1105 = vmatprep.subr.bf16.mxu0 0
    %1106 = vmatpush1.bf16.msra.mxu0 0
    %1107 = vmatprep.subr.bf16.mxu0 0
    %1108 = vmatpush1.bf16.msra.mxu0 0
    %1109 = vmatprep.subr.bf16.mxu0 0
    %1110 = vmatpush1.bf16.msra.mxu0 0
    %1111 = vmatprep.subr.bf16.mxu0 0
    %1112 = vmatpush1.bf16.msra.mxu0 0
    %1113 = vmatprep.mubr.bf16.mxu0 0
    %1114 = vmatmul.mubr.bf16.gmra.mrb[0].mxu0 %v1079
    %v1115 = vpop.f32.mrb[0].mxu0
    %v1116 = vadd.f32 0.0, %v1115
    %v1117 = vpop.f32.mrb[0].mxu0
    %v1118 = vpop.f32.mrb[0].mxu0
    %v1119 = vpop.f32.mrb[0].mxu0
    %1120 = vdwg.mxu0
    %v1122 = vrot.slane %v1116, 6
    %v1124 = vadd.f32 %v978, %v1122
    %v1125 = vxor.u32 %v1124, 2147483648
    %v1126 = vmul.f32 %v1125, 1.442695
    %v1127 = vpow.pop %v1126
    %v1128 = vadd.f32 %v1127, 1.0
    %v1129 = vrcp.pop %v1128
    %v1130 = vmul.f32 1.0, %v1129
    %v1131 = vtanh.pop %v1124
    %v1133 = vrot.slane %v1067, 6
    %v1135 = vmul.f32 %v1130, %v1133
    %1137 = vrot.lane.b32.xlu0 %v1131, 32
    %v1138 = vpop.permute.xlu0 %1137
    %v1140 = vmul.f32 %v1130, %v1138
    %1142 = vrot.lane.b32.xlu0 %v1140, 32
    %v1143 = vpop.permute.xlu0 %1142
    %v1145 = vadd.f32 %v1135, %v1143
    %v1146 = vtanh.pop %v1145
    %1148 = vrot.lane.b32.xlu0 %v1146, 32
    %v1149 = vpop.permute.xlu0 %1148
    %v1151 = vmul.f32 %v1130, %v1149
    %v1152 = vpack.c.bf16 %v1151, %v1151
    %v1154 = vrot.slane %v1152, 1
    %1155 = vrot.lane.b32.xlu0 %v1154, 64
    %v1156 = vpop.permute.xlu0 %1155
    %v1158 = vsel %vm142, %v1156, 0
    %1160 = vmatprep.subr.bf16.mxu0 0
    %1161 = vmatpush1.bf16.msra.mxu0 %v923
    %1162 = vmatprep.subr.bf16.mxu0 0
    %1163 = vmatpush1.bf16.msra.mxu0 %v924
    %1164 = vmatprep.subr.bf16.mxu0 0
    %1165 = vmatpush1.bf16.msra.mxu0 0
    %1166 = vmatprep.subr.bf16.mxu0 0
    %1167 = vmatpush1.bf16.msra.mxu0 0
    %1168 = vmatprep.subr.bf16.mxu0 0
    %1169 = vmatpush1.bf16.msra.mxu0 0
    %1170 = vmatprep.subr.bf16.mxu0 0
    %1171 = vmatpush1.bf16.msra.mxu0 0
    %1172 = vmatprep.subr.bf16.mxu0 0
    %1173 = vmatpush1.bf16.msra.mxu0 0
    %1174 = vmatprep.subr.bf16.mxu0 0
    %1175 = vmatpush1.bf16.msra.mxu0 0
    %1176 = vmatprep.subr.bf16.mxu0 0
    %1177 = vmatpush1.bf16.msra.mxu0 0
    %1178 = vmatprep.subr.bf16.mxu0 0
    %1179 = vmatpush1.bf16.msra.mxu0 0
    %1180 = vmatprep.subr.bf16.mxu0 0
    %1181 = vmatpush1.bf16.msra.mxu0 0
    %1182 = vmatprep.subr.bf16.mxu0 0
    %1183 = vmatpush1.bf16.msra.mxu0 0
    %1184 = vmatprep.subr.bf16.mxu0 0
    %1185 = vmatpush1.bf16.msra.mxu0 0
    %1186 = vmatprep.subr.bf16.mxu0 0
    %1187 = vmatpush1.bf16.msra.mxu0 0
    %1188 = vmatprep.subr.bf16.mxu0 0
    %1189 = vmatpush1.bf16.msra.mxu0 0
    %1190 = vmatprep.subr.bf16.mxu0 0
    %1191 = vmatpush1.bf16.msra.mxu0 0
    %1192 = vmatprep.mubr.bf16.mxu0 0
    %1193 = vmatmul.mubr.bf16.gmra.mrb[0].mxu0 %v1158
    %v1194 = vpop.f32.mrb[0].mxu0
    %v1195 = vadd.f32 0.0, %v1194
    %v1196 = vpop.f32.mrb[0].mxu0
    %v1197 = vpop.f32.mrb[0].mxu0
    %v1198 = vpop.f32.mrb[0].mxu0
    %1199 = vdwg.mxu0
    %v1201 = vrot.slane %v1195, 4
    %v1203 = vadd.f32 %v978, %v1201
    %v1204 = vxor.u32 %v1203, 2147483648
    %v1205 = vmul.f32 %v1204, 1.442695
    %v1206 = vpow.pop %v1205
    %v1207 = vadd.f32 %v1206, 1.0
    %v1208 = vrcp.pop %v1207
    %v1209 = vmul.f32 1.0, %v1208
    %v1210 = vtanh.pop %v1203
    %v1212 = vrot.slane %v1145, 6
    %v1214 = vmul.f32 %v1209, %v1212
    %1216 = vrot.lane.b32.xlu0 %v1210, 32
    %v1217 = vpop.permute.xlu0 %1216
    %v1219 = vmul.f32 %v1209, %v1217
    %1221 = vrot.lane.b32.xlu0 %v1219, 32
    %v1222 = vpop.permute.xlu0 %1221
    %v1224 = vadd.f32 %v1214, %v1222
    %v1225 = vtanh.pop %v1224
    %1227 = vrot.lane.b32.xlu0 %v1225, 32
    %v1228 = vpop.permute.xlu0 %1227
    %v1230 = vmul.f32 %v1209, %v1228
    %v1231 = vpack.c.bf16 %v1230, %v1230
    %v1233 = vrot.slane %v1231, 2
    %1234 = vrot.lane.b32.xlu0 %v1233, 64
    %v1235 = vpop.permute.xlu0 %1234
    %v1237 = vsel %vm142, %v1235, 0
    %1239 = vmatprep.subr.bf16.mxu0 0
    %1240 = vmatpush1.bf16.msra.mxu0 %v923
    %1241 = vmatprep.subr.bf16.mxu0 0
    %1242 = vmatpush1.bf16.msra.mxu0 %v924
    %1243 = vmatprep.subr.bf16.mxu0 0
    %1244 = vmatpush1.bf16.msra.mxu0 0
    %1245 = vmatprep.subr.bf16.mxu0 0
    %1246 = vmatpush1.bf16.msra.mxu0 0
    %1247 = vmatprep.subr.bf16.mxu0 0
    %1248 = vmatpush1.bf16.msra.mxu0 0
    %1249 = vmatprep.subr.bf16.mxu0 0
    %1250 = vmatpush1.bf16.msra.mxu0 0
    %1251 = vmatprep.subr.bf16.mxu0 0
    %1252 = vmatpush1.bf16.msra.mxu0 0
    %1253 = vmatprep.subr.bf16.mxu0 0
    %1254 = vmatpush1.bf16.msra.mxu0 0
    %1255 = vmatprep.subr.bf16.mxu0 0
    %1256 = vmatpush1.bf16.msra.mxu0 0
    %1257 = vmatprep.subr.bf16.mxu0 0
    %1258 = vmatpush1.bf16.msra.mxu0 0
    %1259 = vmatprep.subr.bf16.mxu0 0
    %1260 = vmatpush1.bf16.msra.mxu0 0
    %1261 = vmatprep.subr.bf16.mxu0 0
    %1262 = vmatpush1.bf16.msra.mxu0 0
    %1263 = vmatprep.subr.bf16.mxu0 0
    %1264 = vmatpush1.bf16.msra.mxu0 0
    %1265 = vmatprep.subr.bf16.mxu0 0
    %1266 = vmatpush1.bf16.msra.mxu0 0
    %1267 = vmatprep.subr.bf16.mxu0 0
    %1268 = vmatpush1.bf16.msra.mxu0 0
    %1269 = vmatprep.subr.bf16.mxu0 0
    %1270 = vmatpush1.bf16.msra.mxu0 0
    %1271 = vmatprep.mubr.bf16.mxu0 0
    %1272 = vmatmul.mubr.bf16.gmra.mrb[0].mxu0 %v1237
    %v1273 = vpop.f32.mrb[0].mxu0
    %v1274 = vadd.f32 0.0, %v1273
    %v1275 = vpop.f32.mrb[0].mxu0
    %v1276 = vpop.f32.mrb[0].mxu0
    %v1277 = vpop.f32.mrb[0].mxu0
    %1278 = vdwg.mxu0
    %v1280 = vrot.slane %v1274, 2
    %v1282 = vadd.f32 %v978, %v1280
    %v1283 = vxor.u32 %v1282, 2147483648
    %v1284 = vmul.f32 %v1283, 1.442695
    %v1285 = vpow.pop %v1284
    %v1286 = vadd.f32 %v1285, 1.0
    %v1287 = vrcp.pop %v1286
    %v1288 = vmul.f32 1.0, %v1287
    %v1289 = vtanh.pop %v1282
    %v1291 = vrot.slane %v1224, 6
    %v1293 = vmul.f32 %v1288, %v1291
    %1295 = vrot.lane.b32.xlu0 %v1289, 32
    %v1296 = vpop.permute.xlu0 %1295
    %v1298 = vmul.f32 %v1288, %v1296
    %1300 = vrot.lane.b32.xlu0 %v1298, 32
    %v1301 = vpop.permute.xlu0 %1300
    %v1303 = vadd.f32 %v1293, %v1301
    %v1304 = vtanh.pop %v1303
    %1306 = vrot.lane.b32.xlu0 %v1304, 32
    %v1307 = vpop.permute.xlu0 %1306
    %v1309 = vmul.f32 %v1288, %v1307
    %v1310 = vpack.c.bf16 %v1309, %v1309
    %v1312 = vrot.slane %v1310, 3
    %1313 = vrot.lane.b32.xlu0 %v1312, 64
    %v1314 = vpop.permute.xlu0 %1313
    %v1316 = vsel %vm142, %v1314, 0
    %1318 = vmatprep.subr.bf16.mxu0 0
    %1319 = vmatpush1.bf16.msra.mxu0 %v923
    %1320 = vmatprep.subr.bf16.mxu0 0
    %1321 = vmatpush1.bf16.msra.mxu0 %v924
    %1322 = vmatprep.subr.bf16.mxu0 0
    %1323 = vmatpush1.bf16.msra.mxu0 0
    %1324 = vmatprep.subr.bf16.mxu0 0
    %1325 = vmatpush1.bf16.msra.mxu0 0
    %1326 = vmatprep.subr.bf16.mxu0 0
    %1327 = vmatpush1.bf16.msra.mxu0 0
    %1328 = vmatprep.subr.bf16.mxu0 0
    %1329 = vmatpush1.bf16.msra.mxu0 0
    %1330 = vmatprep.subr.bf16.mxu0 0
    %1331 = vmatpush1.bf16.msra.mxu0 0
    %1332 = vmatprep.subr.bf16.mxu0 0
    %1333 = vmatpush1.bf16.msra.mxu0 0
    %1334 = vmatprep.subr.bf16.mxu0 0
    %1335 = vmatpush1.bf16.msra.mxu0 0
    %1336 = vmatprep.subr.bf16.mxu0 0
    %1337 = vmatpush1.bf16.msra.mxu0 0
    %1338 = vmatprep.subr.bf16.mxu0 0
    %1339 = vmatpush1.bf16.msra.mxu0 0
    %1340 = vmatprep.subr.bf16.mxu0 0
    %1341 = vmatpush1.bf16.msra.mxu0 0
    %1342 = vmatprep.subr.bf16.mxu0 0
    %1343 = vmatpush1.bf16.msra.mxu0 0
    %1344 = vmatprep.subr.bf16.mxu0 0
    %1345 = vmatpush1.bf16.msra.mxu0 0
    %1346 = vmatprep.subr.bf16.mxu0 0
    %1347 = vmatpush1.bf16.msra.mxu0 0
    %1348 = vmatprep.subr.bf16.mxu0 0
    %1349 = vmatpush1.bf16.msra.mxu0 0
    %1350 = vmatprep.mubr.bf16.mxu0 0
    %1351 = vmatmul.mubr.bf16.gmra.mrb[0].mxu0 %v1316
    %v1352 = vpop.f32.mrb[0].mxu0
    %v1353 = vadd.f32 0.0, %v1352
    %v1354 = vpop.f32.mrb[0].mxu0
    %v1355 = vpop.f32.mrb[0].mxu0
    %v1356 = vpop.f32.mrb[0].mxu0
    %1357 = vdwg.mxu0
    %v1358 = vadd.f32 %v981, %v1353
    %v1359 = vxor.u32 %v1358, 2147483648
    %v1360 = vmul.f32 %v1359, 1.442695
    %v1361 = vpow.pop %v1360
    %v1362 = vadd.f32 %v1361, 1.0
    %v1363 = vrcp.pop %v1362
    %v1364 = vmul.f32 1.0, %v1363
    %v1365 = vtanh.pop %v1358
    %v1367 = vrot.slane %v1303, 6
    %v1369 = vmul.f32 %v1364, %v1367
    %1371 = vrot.lane.b32.xlu0 %v1365, 32
    %v1372 = vpop.permute.xlu0 %1371
    %v1374 = vmul.f32 %v1364, %v1372
    %1376 = vrot.lane.b32.xlu0 %v1374, 32
    %v1377 = vpop.permute.xlu0 %1376
    %v1379 = vadd.f32 %v1369, %v1377
    %v1380 = vtanh.pop %v1379
    %1382 = vrot.lane.b32.xlu0 %v1380, 32
    %v1383 = vpop.permute.xlu0 %1382
    %v1385 = vmul.f32 %v1364, %v1383
    %v1386 = vpack.c.bf16 %v1385, %v1385
    %1388 = vrot.lane.b32.xlu0 %v1386, 64
    %v1389 = vpop.permute.xlu0 %1388
    %v1391 = vsel %vm142, %v1389, 0
    %1393 = vmatprep.subr.bf16.mxu0 0
    %1394 = vmatpush1.bf16.msra.mxu0 %v923
    %1395 = vmatprep.subr.bf16.mxu0 0
    %1396 = vmatpush1.bf16.msra.mxu0 %v924
    %1397 = vmatprep.subr.bf16.mxu0 0
    %1398 = vmatpush1.bf16.msra.mxu0 0
    %1399 = vmatprep.subr.bf16.mxu0 0
    %1400 = vmatpush1.bf16.msra.mxu0 0
    %1401 = vmatprep.subr.bf16.mxu0 0
    %1402 = vmatpush1.bf16.msra.mxu0 0
    %1403 = vmatprep.subr.bf16.mxu0 0
    %1404 = vmatpush1.bf16.msra.mxu0 0
    %1405 = vmatprep.subr.bf16.mxu0 0
    %1406 = vmatpush1.bf16.msra.mxu0 0
    %1407 = vmatprep.subr.bf16.mxu0 0
    %1408 = vmatpush1.bf16.msra.mxu0 0
    %1409 = vmatprep.subr.bf16.mxu0 0
    %1410 = vmatpush1.bf16.msra.mxu0 0
    %1411 = vmatprep.subr.bf16.mxu0 0
    %1412 = vmatpush1.bf16.msra.mxu0 0
    %1413 = vmatprep.subr.bf16.mxu0 0
    %1414 = vmatpush1.bf16.msra.mxu0 0
    %1415 = vmatprep.subr.bf16.mxu0 0
    %1416 = vmatpush1.bf16.msra.mxu0 0
    %1417 = vmatprep.subr.bf16.mxu0 0
    %1418 = vmatpush1.bf16.msra.mxu0 0
    %1419 = vmatprep.subr.bf16.mxu0 0
    %1420 = vmatpush1.bf16.msra.mxu0 0
    %1421 = vmatprep.subr.bf16.mxu0 0
    %1422 = vmatpush1.bf16.msra.mxu0 0
    %1423 = vmatprep.subr.bf16.mxu0 0
    %1424 = vmatpush1.bf16.msra.mxu0 0
    %1425 = vmatprep.mubr.bf16.mxu0 0
    %1426 = vmatmul.mubr.bf16.gmra.mrb[0].mxu0 %v1391
    %v1427 = vpop.f32.mrb[0].mxu0
    %v1428 = vadd.f32 0.0, %v1427
    %v1429 = vpop.f32.mrb[0].mxu0
    %v1430 = vpop.f32.mrb[0].mxu0
    %v1431 = vpop.f32.mrb[0].mxu0
    %1432 = vdwg.mxu0
    %v1434 = vrot.slane %v1428, 6
    %v1436 = vadd.f32 %v981, %v1434
    %v1437 = vxor.u32 %v1436, 2147483648
    %v1438 = vmul.f32 %v1437, 1.442695
    %v1439 = vpow.pop %v1438
    %v1440 = vadd.f32 %v1439, 1.0
    %v1441 = vrcp.pop %v1440
    %v1442 = vmul.f32 1.0, %v1441
    %v1443 = vtanh.pop %v1436
    %v1445 = vrot.slane %v1379, 6
    %v1447 = vmul.f32 %v1442, %v1445
    %1449 = vrot.lane.b32.xlu0 %v1443, 32
    %v1450 = vpop.permute.xlu0 %1449
    %v1452 = vmul.f32 %v1442, %v1450
    %1454 = vrot.lane.b32.xlu0 %v1452, 32
    %v1455 = vpop.permute.xlu0 %1454
    %v1457 = vadd.f32 %v1447, %v1455
    %v1458 = vtanh.pop %v1457
    %1460 = vrot.lane.b32.xlu0 %v1458, 32
    %v1461 = vpop.permute.xlu0 %1460
    %v1463 = vmul.f32 %v1442, %v1461
    %v1464 = vpack.c.bf16 %v1463, %v1463
    %v1466 = vrot.slane %v1464, 1
    %1467 = vrot.lane.b32.xlu0 %v1466, 64
    %v1468 = vpop.permute.xlu0 %1467
    %v1470 = vsel %vm142, %v1468, 0
    %1472 = vmatprep.subr.bf16.mxu0 0
    %1473 = vmatpush1.bf16.msra.mxu0 %v923
    %1474 = vmatprep.subr.bf16.mxu0 0
    %1475 = vmatpush1.bf16.msra.mxu0 %v924
    %1476 = vmatprep.subr.bf16.mxu0 0
    %1477 = vmatpush1.bf16.msra.mxu0 0
    %1478 = vmatprep.subr.bf16.mxu0 0
    %1479 = vmatpush1.bf16.msra.mxu0 0
    %1480 = vmatprep.subr.bf16.mxu0 0
    %1481 = vmatpush1.bf16.msra.mxu0 0
    %1482 = vmatprep.subr.bf16.mxu0 0
    %1483 = vmatpush1.bf16.msra.mxu0 0
    %1484 = vmatprep.subr.bf16.mxu0 0
    %1485 = vmatpush1.bf16.msra.mxu0 0
    %1486 = vmatprep.subr.bf16.mxu0 0
    %1487 = vmatpush1.bf16.msra.mxu0 0
    %1488 = vmatprep.subr.bf16.mxu0 0
    %1489 = vmatpush1.bf16.msra.mxu0 0
    %1490 = vmatprep.subr.bf16.mxu0 0
    %1491 = vmatpush1.bf16.msra.mxu0 0
    %1492 = vmatprep.subr.bf16.mxu0 0
    %1493 = vmatpush1.bf16.msra.mxu0 0
    %1494 = vmatprep.subr.bf16.mxu0 0
    %1495 = vmatpush1.bf16.msra.mxu0 0
    %1496 = vmatprep.subr.bf16.mxu0 0
    %1497 = vmatpush1.bf16.msra.mxu0 0
    %1498 = vmatprep.subr.bf16.mxu0 0
    %1499 = vmatpush1.bf16.msra.mxu0 0
    %1500 = vmatprep.subr.bf16.mxu0 0
    %1501 = vmatpush1.bf16.msra.mxu0 0
    %1502 = vmatprep.subr.bf16.mxu0 0
    %1503 = vmatpush1.bf16.msra.mxu0 0
    %1504 = vmatprep.mubr.bf16.mxu0 0
    %1505 = vmatmul.mubr.bf16.gmra.mrb[0].mxu0 %v1470
    %v1506 = vpop.f32.mrb[0].mxu0
    %v1507 = vadd.f32 0.0, %v1506
    %v1508 = vpop.f32.mrb[0].mxu0
    %v1509 = vpop.f32.mrb[0].mxu0
    %v1510 = vpop.f32.mrb[0].mxu0
    %1511 = vdwg.mxu0
    %v1513 = vrot.slane %v1507, 4
    %v1515 = vadd.f32 %v981, %v1513
    %v1516 = vxor.u32 %v1515, 2147483648
    %v1517 = vmul.f32 %v1516, 1.442695
    %v1518 = vpow.pop %v1517
    %v1519 = vadd.f32 %v1518, 1.0
    %v1520 = vrcp.pop %v1519
    %v1521 = vmul.f32 1.0, %v1520
    %v1522 = vtanh.pop %v1515
    %v1524 = vrot.slane %v1457, 6
    %v1526 = vmul.f32 %v1521, %v1524
    %1528 = vrot.lane.b32.xlu0 %v1522, 32
    %v1529 = vpop.permute.xlu0 %1528
    %v1531 = vmul.f32 %v1521, %v1529
    %1533 = vrot.lane.b32.xlu0 %v1531, 32
    %v1534 = vpop.permute.xlu0 %1533
    %v1536 = vadd.f32 %v1526, %v1534
    %v1537 = vtanh.pop %v1536
    %1539 = vrot.lane.b32.xlu0 %v1537, 32
    %v1540 = vpop.permute.xlu0 %1539
    %v1542 = vmul.f32 %v1521, %v1540
    %v1543 = vpack.c.bf16 %v1542, %v1542
    %v1545 = vrot.slane %v1543, 2
    %1546 = vrot.lane.b32.xlu0 %v1545, 64
    %v1547 = vpop.permute.xlu0 %1546
    %v1549 = vsel %vm142, %v1547, 0
    %1551 = vmatprep.subr.bf16.mxu0 0
    %1552 = vmatpush1.bf16.msra.mxu0 %v923
    %1553 = vmatprep.subr.bf16.mxu0 0
    %1554 = vmatpush1.bf16.msra.mxu0 %v924
    %1555 = vmatprep.subr.bf16.mxu0 0
    %1556 = vmatpush1.bf16.msra.mxu0 0
    %1557 = vmatprep.subr.bf16.mxu0 0
    %1558 = vmatpush1.bf16.msra.mxu0 0
    %1559 = vmatprep.subr.bf16.mxu0 0
    %1560 = vmatpush1.bf16.msra.mxu0 0
    %1561 = vmatprep.subr.bf16.mxu0 0
    %1562 = vmatpush1.bf16.msra.mxu0 0
    %1563 = vmatprep.subr.bf16.mxu0 0
    %1564 = vmatpush1.bf16.msra.mxu0 0
    %1565 = vmatprep.subr.bf16.mxu0 0
    %1566 = vmatpush1.bf16.msra.mxu0 0
    %1567 = vmatprep.subr.bf16.mxu0 0
    %1568 = vmatpush1.bf16.msra.mxu0 0
    %1569 = vmatprep.subr.bf16.mxu0 0
    %1570 = vmatpush1.bf16.msra.mxu0 0
    %1571 = vmatprep.subr.bf16.mxu0 0
    %1572 = vmatpush1.bf16.msra.mxu0 0
    %1573 = vmatprep.subr.bf16.mxu0 0
    %1574 = vmatpush1.bf16.msra.mxu0 0
    %1575 = vmatprep.subr.bf16.mxu0 0
    %1576 = vmatpush1.bf16.msra.mxu0 0
    %1577 = vmatprep.subr.bf16.mxu0 0
    %1578 = vmatpush1.bf16.msra.mxu0 0
    %1579 = vmatprep.subr.bf16.mxu0 0
    %1580 = vmatpush1.bf16.msra.mxu0 0
    %1581 = vmatprep.subr.bf16.mxu0 0
    %1582 = vmatpush1.bf16.msra.mxu0 0
    %1583 = vmatprep.mubr.bf16.mxu0 0
    %1584 = vmatmul.mubr.bf16.gmra.mrb[0].mxu0 %v1549
    %v1585 = vpop.f32.mrb[0].mxu0
    %v1586 = vadd.f32 0.0, %v1585
    %v1587 = vpop.f32.mrb[0].mxu0
    %v1588 = vpop.f32.mrb[0].mxu0
    %v1589 = vpop.f32.mrb[0].mxu0
    %1590 = vdwg.mxu0
    %v1592 = vrot.slane %v1586, 2
    %v1594 = vadd.f32 %v981, %v1592
    %v1595 = vxor.u32 %v1594, 2147483648
    %v1596 = vmul.f32 %v1595, 1.442695
    %v1597 = vpow.pop %v1596
    %v1598 = vadd.f32 %v1597, 1.0
    %v1599 = vrcp.pop %v1598
    %v1600 = vmul.f32 1.0, %v1599
    %v1601 = vtanh.pop %v1594
    %v1603 = vrot.slane %v1536, 6
    %v1605 = vmul.f32 %v1600, %v1603
    %1607 = vrot.lane.b32.xlu0 %v1601, 32
    %v1608 = vpop.permute.xlu0 %1607
    %v1610 = vmul.f32 %v1600, %v1608
    %1612 = vrot.lane.b32.xlu0 %v1610, 32
    %v1613 = vpop.permute.xlu0 %1612
    %v1615 = vadd.f32 %v1605, %v1613
    %v1616 = vtanh.pop %v1615
    %1618 = vrot.lane.b32.xlu0 %v1616, 32
    %v1619 = vpop.permute.xlu0 %1618
    %v1621 = vmul.f32 %v1600, %v1619
    %1623 = vrot.lane.b32.xlu0 %v1621, 64
    %v1624 = vpop.permute.xlu0 %1623
    %1627 = vrot.lane.b32.xlu0 %v1008, 96
    %v1628 = vpop.permute.xlu0 %1627
    %v1630 = vsel %vm142, %v1624, %v1628
    %v1631 = vld [vmem:[%s3] sm:$0xff]
    %v1632 = vld [vmem:[%s3 + $0x8] sm:$0xff]
    %v1633 = vld [vmem:[%s3 + $0x10] sm:$0xff]
    %v1634 = vld [vmem:[%s3 + $0x18] sm:$0xff]
    %v1635 = vld [vmem:[%s3 + $0x20] sm:$0xff]
    %v1636 = vld [vmem:[%s3 + $0x28] sm:$0xff]
    %v1637 = vld [vmem:[%s3 + $0x30] sm:$0xff]
    %v1638 = vld [vmem:[%s3 + $0x38] sm:$0xff]
    %v1639 = vpack.c.bf16 %v1632, %v1631
    %v1640 = vpack.c.bf16 %v1634, %v1633
    %v1641 = vpack.c.bf16 %v1636, %v1635
    %v1642 = vpack.c.bf16 %v1638, %v1637
    %v1643 = vld [vmem:[%s3 + $0x40] sm:$0x1]
    %v1644 = vpack.c.bf16 %v1630, %v1630
    %v1645 = vlaneseq
    %v1646 = vshrl.u32 %v1645, 7
    %v1647 = vsub.s32 0, %v1646
    %v1648 = vrot.slane %v1643, %v1647
    %v1650 = vrot.slane %v1644, 3
    %v1652 = vsel %vm939, %v1650, 0
    %1654 = vmatprep.subr.bf16.mxu0 0
    %1655 = vmatpush1.bf16.msra.mxu0 %v1639
    %1656 = vmatprep.subr.bf16.mxu0 0
    %1657 = vmatpush1.bf16.msra.mxu0 %v1640
    %1658 = vmatprep.subr.bf16.mxu0 0
    %1659 = vmatpush1.bf16.msra.mxu0 %v1641
    %1660 = vmatprep.subr.bf16.mxu0 0
    %1661 = vmatpush1.bf16.msra.mxu0 %v1642
    %1662 = vmatprep.subr.bf16.mxu0 0
    %1663 = vmatpush1.bf16.msra.mxu0 0
    %1664 = vmatprep.subr.bf16.mxu0 0
    %1665 = vmatpush1.bf16.msra.mxu0 0
    %1666 = vmatprep.subr.bf16.mxu0 0
    %1667 = vmatpush1.bf16.msra.mxu0 0
    %1668 = vmatprep.subr.bf16.mxu0 0
    %1669 = vmatpush1.bf16.msra.mxu0 0
    %1670 = vmatprep.subr.bf16.mxu0 0
    %1671 = vmatpush1.bf16.msra.mxu0 0
    %1672 = vmatprep.subr.bf16.mxu0 0
    %1673 = vmatpush1.bf16.msra.mxu0 0
    %1674 = vmatprep.subr.bf16.mxu0 0
    %1675 = vmatpush1.bf16.msra.mxu0 0
    %1676 = vmatprep.subr.bf16.mxu0 0
    %1677 = vmatpush1.bf16.msra.mxu0 0
    %1678 = vmatprep.subr.bf16.mxu0 0
    %1679 = vmatpush1.bf16.msra.mxu0 0
    %1680 = vmatprep.subr.bf16.mxu0 0
    %1681 = vmatpush1.bf16.msra.mxu0 0
    %1682 = vmatprep.subr.bf16.mxu0 0
    %1683 = vmatpush1.bf16.msra.mxu0 0
    %1684 = vmatprep.subr.bf16.mxu0 0
    %1685 = vmatpush1.bf16.msra.mxu0 0
    %1686 = vmatprep.mubr.bf16.mxu0 0
    %1687 = vmatmul.mubr.bf16.gmra.mrb[0].mxu0 %v1652
    %v1688 = vpop.f32.mrb[0].mxu0
    %v1689 = vadd.f32 %v1648, %v1688
    %v1690 = vpop.f32.mrb[0].mxu0
    %v1691 = vpop.f32.mrb[0].mxu0
    %v1692 = vpop.f32.mrb[0].mxu0
    %1693 = vdwg.mxu0
    %vm1694 = vcmask 9216
    %1695 = vst.msk [vmem:[#allocation9] sm:$0x3] %vm1694, %v1689
    // Predicated region
    $region18: #{model_forward.1} parent=1 // pred_check
      _
    $region19: #{model_forward.1} parent=1 // pred_check_branch
      %1697 = sbr.rel (0) target = $region21
    $region20: #{model_forward.1} parent=1 // pred_region
      %s1699 = ssub.s32 32, 32
      %1700 = vsyncadd [#allocation8], %s1699
      %s1702 = sshll.u32 [#allocation9], 4
      %s1703 = int_to_ptr.vmem [resolvable:$true] %s1702
      %1705 = dma.vmem_to_hbm [thread:$0]  %s1703, 32, %s4, [#allocation8]
    $region21: #{model_forward.1} parent=1 // pred_fallthru
      _
    // Predicated region
    $region22: #{model_forward.1} parent=1 // pred_check
      _
    $region23: #{model_forward.1} parent=1 // pred_check_branch
      %1707 = sbr.rel (0) target = $region25
    $region24: #{model_forward.1} parent=1 // pred_region
      %1708 = dma.done [#allocation8], 32
    $region25: #{model_forward.1} parent=1 // pred_fallthru
      _
    %1709 = vsyncpa [#allocation7], 1
    %1710 = vsyncpa [#allocation8], 1

</llo_original>
